<compile_context>
chip_gen: v5e
topology: v5e:2x2
jax: 0.10.0
libtpu: 0.0.40
codegen_flags: <defaults>
</compile_context>

<pallas_src>
import functools

import jax
import jax.numpy as jnp
import numpy as np
from jax import lax
from jax.experimental import pallas as pl
from jax.experimental.pallas import tpu as pltpu


# ----------------------------------------------------------------------------
# Fused SPP kernel: cv1 (1x1 conv + folded BN + SiLU) -> chained k=5 maxpools
# -> cv2 (1x1 conv + folded BN + SiLU), all in VMEM, one batch image per step.
# ----------------------------------------------------------------------------
def _spp_fused_kernel(x_ref, w1_ref, b1_ref, w2_ref, b2_ref, o_ref, pad_ref,
                      *, H, W, k, n_pools, wl, wr):
    # x_ref : (1, H, W, C1)        bf16, one image, channels-last
    # w1_ref: (C1, C_)             bf16      b1_ref: (1, C_)  f32
    # w2_ref: (n_pools+1, C_, C2)  bf16      b2_ref: (1, C2)  f32
    # o_ref : (1, H, W, C2)        f32
    # pad_ref: (H+2p, wl+W+wr, C_) f32 scratch; border kept at -inf.
    p = k // 2
    C1 = x_ref.shape[3]
    C_ = w1_ref.shape[1]
    C2 = w2_ref.shape[2]
    HW = H * W
    Hp = H + 2 * p
    Wp = wl + W + wr

    # ---- cv1: 1x1 conv (BN folded) as one bf16 MXU matmul with f32 accumulation;
    #      bias + SiLU stay in f32 (reciprocal goes to the EUP).
    xb = x_ref[0].reshape(HW, C1)                               # layout no-op (W % 8 == 0)
    y1 = jnp.dot(xb, w1_ref[...], preferred_element_type=jnp.float32) + b1_ref[...]
    y1 = y1 * pl.reciprocal(1.0 + jnp.exp(-y1), approx=True)    # SiLU, f32

    # ---- cv2 accumulation, group 0 (the un-pooled y1).  The concat never exists.
    acc = jnp.dot(y1.astype(jnp.bfloat16), w2_ref[0],
                  preferred_element_type=jnp.float32)           # (HW, C2) f32

    # ---- -inf border of the pad scratch: four aligned strips only (the interior is
    #      overwritten every pooling stage, so it never needs initialization).
    pad_ref[0:p, :, :] = jnp.full((p, Wp, C_), -jnp.inf, jnp.float32)
    pad_ref[p + H:, :, :] = jnp.full((p, Wp, C_), -jnp.inf, jnp.float32)
    pad_ref[:, 0:wl, :] = jnp.full((Hp, wl, C_), -jnp.inf, jnp.float32)
    pad_ref[:, wl + W:, :] = jnp.full((Hp, wr, C_), -jnp.inf, jnp.float32)

    # Column-pass shifts (+/-1..+/-p) expressed as non-negative rolls of the merged
    # (H*Wp, C_) view.  The circular wrap only lands in pad columns that the extracted
    # window never reads (wl, wr >= p), so the max is unaffected; the symmetric shift
    # set also makes the result independent of the roll direction convention.
    col_shifts = tuple((-d) % (H * Wp) for d in range(-p, p + 1) if d != 0)

    def stage(s, carry):
        acc, cur = carry                                        # cur: (H, W, C_) f32
        pad_ref[p:p + H, wl:wl + W, :] = cur                    # aligned interior store
        xp = pad_ref[...].reshape(Hp * Wp, C_)                  # free merge (Wp % 8 == 0)
        # Row pass: shifted slices along the merged axis; offsets are multiples of Wp.
        t = xp[0:H * Wp]
        for dy in range(1, k):
            t = jnp.maximum(t, xp[dy * Wp:(dy + H) * Wp])
        # Column pass: XLU rolls co-issue with the VPU maxima (no unaligned slices).
        m = t
        for sh in col_shifts:
            m = jnp.maximum(m, pltpu.roll(t, sh, axis=0))
        nxt = m.reshape(H, Wp, C_)[:, wl:wl + W, :]             # aligned extraction
        # cv2 accumulation for group s+1 (effective pool kernel = k + (k-1)*(s+1) - ... chain)
        w2g = w2_ref[s + 1]                                     # (C_, C2) bf16, dynamic lead index
        acc = acc + jnp.dot(nxt.reshape(HW, C_).astype(jnp.bfloat16), w2g,
                            preferred_element_type=jnp.float32)
        return acc, nxt

    acc, _ = lax.fori_loop(0, n_pools, stage, (acc, y1.reshape(H, W, C_)))

    # ---- cv2 epilogue: folded-BN bias + SiLU in f32, one store per image.
    y2 = acc + b2_ref[...]
    y2 = y2 * pl.reciprocal(1.0 + jnp.exp(-y2), approx=True)
    o_ref[0] = y2.reshape(H, W, C2).astype(o_ref.dtype)


# ----------------------------------------------------------------------------
# Wrappers
# ----------------------------------------------------------------------------
def _chain_config(pool_ks):
    """SPP's pools must be realizable as a chain of repeated k-pools (SPPF identity):
    pool_{k+(k-1)*i} = (pool_k) composed (i+1) times.  e.g. (5, 9, 13) -> k=5, 3 stages."""
    k = int(pool_ks[0])
    if k < 3 or k % 2 != 1:
        raise ValueError(f"first pool kernel must be odd and >= 3, got {k}")
    expected = tuple(k + (k - 1) * i for i in range(len(pool_ks)))
    if tuple(int(kk) for kk in pool_ks) != expected:
        raise ValueError(f"pool_ks={tuple(pool_ks)} is not the chain {expected} of repeated {k}-pools")
    return k, len(pool_ks)


def spp_forward_nhwc(x_nhwc, params, pool_ks=(5, 9, 13)):
    """Fused SPP forward, NHWC in / NHWC out.  x_nhwc: (N, H, W, C1) -> (N, H, W, C2) f32.

    This is the transpose-free path; use it inside an NHWC end-to-end network."""
    (w1, b1), (w2, b2) = params                  # w1:(C1,C_), w2:((n_pools+1)*C_, C2)
    k, n_pools = _chain_config(pool_ks)
    N, H, W, C1 = x_nhwc.shape
    C_ = w1.shape[1]
    C2 = w2.shape[1]
    assert w1.shape[0] == C1
    assert w2.shape[0] == (n_pools + 1) * C_
    assert W % 8 == 0, ("pad W to a multiple of 8 so the in-kernel (HW,C)<->(H,W,C) "
                        "reshapes stay layout no-ops")
    p = k // 2
    wl = wr = 8                                  # sublane-aligned -inf pads (multiple of 8, >= p)
    assert wl >= p and wr >= p

    # bf16 into the MXU (input + weights); biases / accumulation / epilogues stay f32.
    # In a bf16 NHWC network the producer already emits bf16 and these casts vanish.
    xb = x_nhwc.astype(jnp.bfloat16)
    w1b = w1.astype(jnp.bfloat16)
    w2b = w2.astype(jnp.bfloat16).reshape(n_pools + 1, C_, C2)   # group-major for in-kernel fetch
    b1f = b1.astype(jnp.float32)
    b2f = b2.astype(jnp.float32)

    Hp, Wp = H + 2 * p, wl + W + wr
    # Rough per-step VMEM estimate: double-buffered blocks + scratch + f32 temporaries.
    est_bytes = (2 * H * W * C1 * 2 + 2 * H * W * C2 * 4
                 + 2 * (C1 * C_ + (n_pools + 1) * C_ * C2) * 2 + 2 * (C_ + C2) * 4
                 + Hp * Wp * C_ * 4
                 + 6 * H * W * max(C_, C2) * 4)
    cparams = {"dimension_semantics": ("parallel",)}
    if est_bytes > 28 * 1024 * 1024:
        # v6e: raise the scoped-VMEM limit instead of strip-tiling moderate maps.
        # TODO(synk): v7x/v5e at production sizes need an H-strip grid axis with a
        #             p*n_pools-row halo (and single-buffered weights) instead.
        cparams["vmem_limit_bytes"] = int(min(est_bytes * 1.25, 100 * 1024 * 1024))

    kern = functools.partial(_spp_fused_kernel, H=H, W=W, k=k,
                             n_pools=n_pools, wl=wl, wr=wr)
    return pl.pallas_call(
        kern,
        out_shape=jax.ShapeDtypeStruct((N, H, W, C2), jnp.float32),
        grid=(N,),
        in_specs=[
            pl.BlockSpec((1, H, W, C1), lambda n: (n, 0, 0, 0)),
            # Weights / bias are grid-invariant (constant index_map) so they are only
            # fetched once.  TODO(synk): at production channel counts also drop their
            # second pipeline buffer (pl.Buffered(1) / stage once into VMEM scratch).
            pl.BlockSpec((C1, C_), lambda n: (0, 0)),
            pl.BlockSpec((1, C_), lambda n: (0, 0)),
            pl.BlockSpec((n_pools + 1, C_, C2), lambda n: (0, 0, 0)),
            pl.BlockSpec((1, C2), lambda n: (0, 0)),
        ],
        out_specs=pl.BlockSpec((1, H, W, C2), lambda n: (n, 0, 0, 0)),
        scratch_shapes=[pltpu.VMEM((Hp, Wp, C_), jnp.float32)],
        compiler_params=pltpu.CompilerParams(**cparams),
    )(xb, w1b, b1f, w2b, b2f)


def spp_forward_nchw(x_nchw, params, pool_ks=(5, 9, 13)):
    """Compatibility wrapper matching the PyTorch module's NCHW interface.
    NOTE: these two transposes are exactly the HBM round trips flagged by the perf
    review -- in an NHWC end-to-end network call spp_forward_nhwc directly."""
    x = jnp.transpose(x_nchw, (0, 2, 3, 1))
    y = spp_forward_nhwc(x, params, pool_ks)
    return jnp.transpose(y, (0, 3, 1, 2))


# ----------------------------------------------------------------------------
# Deterministic parameter setup with BatchNorm folded into the 1x1 conv.
# ----------------------------------------------------------------------------
def make_conv_block_params(key, cin, cout, eps=1e-3):
    k_w, k_g, k_b, k_m, k_v = jax.random.split(key, 5)
    w = 0.1 * jax.random.normal(k_w, (cout, cin, 1, 1), jnp.float32)  # OIHW like nn.Conv2d
    gamma = 1.0 + 0.1 * jax.random.normal(k_g, (cout,), jnp.float32)
    beta = 0.1 * jax.random.normal(k_b, (cout,), jnp.float32)
    mean = 0.1 * jax.random.normal(k_m, (cout,), jnp.float32)
    var = jax.random.uniform(k_v, (cout,), jnp.float32, 0.5, 1.5)
    scale = gamma / jnp.sqrt(var + eps)
    w_folded = (w[:, :, 0, 0] * scale[:, None]).T          # (Cin, Cout)
    b_folded = (beta - mean * scale)[None, :]               # (1, Cout)
    return w_folded, b_folded


# ----------------------------------------------------------------------------
# Pure-JAX reference (independent k=5,9,13 pools -> also validates SPPF chaining).
# It mirrors the kernel's precision recipe (bf16 matmul operands, f32 accumulation,
# f32 bias/SiLU) so only the approximate EUP reciprocal differs.
# ----------------------------------------------------------------------------
def _ref_conv_silu(x_nhwc, w, b):
    y = jnp.einsum("nhwc,cd->nhwd",
                   x_nhwc.astype(jnp.bfloat16), w.astype(jnp.bfloat16),
                   preferred_element_type=jnp.float32) + b[0]
    return y * jax.nn.sigmoid(y)


def _ref_maxpool(x_nhwc, k):
    p = k // 2
    return lax.reduce_window(
        x_nhwc, -jnp.inf, lax.max,
        window_dimensions=(1, k, k, 1), window_strides=(1, 1, 1, 1),
        padding=((0, 0), (p, p), (p, p), (0, 0)))


def spp_reference_nhwc(x_nhwc, params, pool_ks=(5, 9, 13)):
    (w1, b1), (w2, b2) = params
    y1 = _ref_conv_silu(x_nhwc.astype(jnp.float32), w1, b1)
    cat = jnp.concatenate([y1] + [_ref_maxpool(y1, kk) for kk in pool_ks], axis=-1)
    return _ref_conv_silu(cat, w2, b2)


# ----------------------------------------------------------------------------
if __name__ == "__main__":
    # SPP(c1=8, c2=8): c_ = 4, cv2 input channels = 4*(3+1) = 16.
    # NOTE: toy channel counts leave most vector lanes idle; all perf tuning should be
    # validated at production channel counts (C_, C2 >= 128) where stores are lane-dense.
    N, C1, H, W = 2, 8, 16, 16
    C2 = 8
    C_ = C1 // 2
    pool_ks = (5, 9, 13)

    key = jax.random.PRNGKey(0)
    kx, k1, k2 = jax.random.split(key, 3)
    x_nchw = jax.random.normal(kx, (N, C1, H, W), jnp.float32)   # PyTorch-layout input

    params = (
        make_conv_block_params(k1, C1, C_),                       # cv1
        make_conv_block_params(k2, C_ * (len(pool_ks) + 1), C2),  # cv2
    )

    # Primary, transpose-free NHWC path (test-data prep transpose only; in a real NHWC
    # network this transpose does not exist).
    x_nhwc = jnp.transpose(x_nchw, (0, 2, 3, 1))
    out_nhwc = jax.block_until_ready(spp_forward_nhwc(x_nhwc, params, pool_ks))
    ref_nhwc = jax.block_until_ready(spp_reference_nhwc(x_nhwc, params, pool_ks))
    # Tolerance covers bf16 MXU operands + approximate (EUP) reciprocal in the SiLUs.
    np.testing.assert_allclose(np.asarray(out_nhwc), np.asarray(ref_nhwc),
                               rtol=5e-3, atol=5e-3)
    assert out_nhwc.shape == (N, H, W, C2)

    # NCHW compatibility wrapper (exact PyTorch module layout).
    out_nchw = jax.block_until_ready(spp_forward_nchw(x_nchw, params, pool_ks))
    np.testing.assert_allclose(np.asarray(out_nchw),
                               np.asarray(jnp.transpose(ref_nhwc, (0, 3, 1, 2))),
                               rtol=5e-3, atol=5e-3)
    assert out_nchw.shape == (N, C2, H, W)

    print("KERNEL_OK")
</pallas_src>

<mosaic_0001>
module attributes {stable_mosaic.version = 11 : i64} {
  func.func @_spp_fused_kernel(%arg0: i32, %arg1: memref<1x16x16x8xbf16, #tpu.memory_space<vmem>>, %arg2: memref<8x4xbf16, #tpu.memory_space<vmem>>, %arg3: memref<1x4xf32, #tpu.memory_space<vmem>>, %arg4: memref<4x4x8xbf16, #tpu.memory_space<vmem>>, %arg5: memref<1x8xf32, #tpu.memory_space<vmem>>, %arg6: memref<1x16x16x8xf32, #tpu.memory_space<vmem>>, %arg7: memref<20x32x4xf32, #tpu.memory_space<vmem>>) attributes {dimension_semantics = [#tpu.dimension_semantics<parallel>], iteration_bounds = array<i64: 2>, scalar_prefetch = 0 : i64, scratch_operands = 1 : i64, tpu.core_type = #tpu.core_type<tc>, window_params = [{transform_indices = @transform_0, window_bounds = array<i64: 1, 16, 16, 8>}, {pipeline_mode = #tpu.pipeline_mode<synchronous>, transform_indices = @transform_1, window_bounds = array<i64: 8, 4>}, {pipeline_mode = #tpu.pipeline_mode<synchronous>, transform_indices = @transform_2, window_bounds = array<i64: 1, 4>}, {pipeline_mode = #tpu.pipeline_mode<synchronous>, transform_indices = @transform_3, window_bounds = array<i64: 4, 4, 8>}, {pipeline_mode = #tpu.pipeline_mode<synchronous>, transform_indices = @transform_4, window_bounds = array<i64: 1, 8>}, {transform_indices = @transform_5, window_bounds = array<i64: 1, 16, 16, 8>}]} {
    %c0 = arith.constant 0 : index
    %c0_0 = arith.constant 0 : index
    %c0_1 = arith.constant 0 : index
    %c0_2 = arith.constant 0 : index
    %0 = vector.load %arg1[%c0, %c0_0, %c0_1, %c0_2] : memref<1x16x16x8xbf16, #tpu.memory_space<vmem>>, vector<1x16x16x8xbf16>
    %1 = vector.shape_cast %0 : vector<1x16x16x8xbf16> to vector<16x16x8xbf16>
    %2 = vector.shape_cast %1 : vector<16x16x8xbf16> to vector<256x8xbf16>
    %c0_3 = arith.constant 0 : index
    %c0_4 = arith.constant 0 : index
    %3 = vector.load %arg2[%c0_3, %c0_4] : memref<8x4xbf16, #tpu.memory_space<vmem>>, vector<8x4xbf16>
    %cst = arith.constant dense<0.000000e+00> : vector<256x4xf32>
    %4 = tpu.matmul %2, %3, %cst {dimension_numbers = #tpu.dot_dimension_numbers<[1], [0], [0], [1], [0, 0, 1, 1], [], []>} : vector<256x8xbf16>, vector<8x4xbf16>, vector<256x4xf32> -> vector<256x4xf32>
    %c0_5 = arith.constant 0 : index
    %c0_6 = arith.constant 0 : index
    %5 = vector.load %arg3[%c0_5, %c0_6] : memref<1x4xf32, #tpu.memory_space<vmem>>, vector<1x4xf32>
    %6 = vector.broadcast %5 : vector<1x4xf32> to vector<256x4xf32>
    %7 = arith.addf %4, %6 : vector<256x4xf32>
    %cst_7 = arith.constant 0.000000e+00 : f32
    %8 = vector.broadcast %cst_7 : f32 to vector<256x4xf32>
    %9 = arith.subf %8, %7 : vector<256x4xf32>
    %10 = math.exp %9 : vector<256x4xf32>
    %cst_8 = arith.constant 1.000000e+00 : f32
    %11 = vector.broadcast %cst_8 : f32 to vector<256x4xf32>
    %12 = arith.addf %11, %10 : vector<256x4xf32>
    %13 = tpu.reciprocal %12 {approx = true} : vector<256x4xf32> -> vector<256x4xf32>
    %14 = arith.mulf %7, %13 : vector<256x4xf32>
    %15 = arith.truncf %14 : vector<256x4xf32> to vector<256x4xbf16>
    %c0_9 = arith.constant 0 : index
    %c0_10 = arith.constant 0 : index
    %c0_11 = arith.constant 0 : index
    %16 = vector.load %arg4[%c0_9, %c0_10, %c0_11] : memref<4x4x8xbf16, #tpu.memory_space<vmem>>, vector<1x4x8xbf16>
    %17 = vector.shape_cast %16 : vector<1x4x8xbf16> to vector<4x8xbf16>
    %cst_12 = arith.constant dense<0.000000e+00> : vector<256x8xf32>
    %18 = tpu.matmul %15, %17, %cst_12 {dimension_numbers = #tpu.dot_dimension_numbers<[1], [0], [0], [1], [0, 0, 1, 1], [], []>} : vector<256x4xbf16>, vector<4x8xbf16>, vector<256x8xf32> -> vector<256x8xf32>
    %cst_13 = arith.constant 0xFF800000 : f32
    %19 = vector.broadcast %cst_13 : f32 to vector<2x32x4xf32>
    %c0_14 = arith.constant 0 : index
    %c0_15 = arith.constant 0 : index
    %c0_16 = arith.constant 0 : index
    %20 = vector.load %arg7[%c0_14, %c0_15, %c0_16] : memref<20x32x4xf32, #tpu.memory_space<vmem>>, vector<2x32x4xf32>
    tpu.vector_store %arg7[%c0_14, %c0_15, %c0_16], %19 {strides = array<i32>} : memref<20x32x4xf32, #tpu.memory_space<vmem>>, vector<2x32x4xf32>,
    %cst_17 = arith.constant 0xFF800000 : f32
    %21 = vector.broadcast %cst_17 : f32 to vector<2x32x4xf32>
    %c18 = arith.constant 18 : index
    %c0_18 = arith.constant 0 : index
    %c0_19 = arith.constant 0 : index
    %22 = vector.load %arg7[%c18, %c0_18, %c0_19] : memref<20x32x4xf32, #tpu.memory_space<vmem>>, vector<2x32x4xf32>
    tpu.vector_store %arg7[%c18, %c0_18, %c0_19], %21 {strides = array<i32>} : memref<20x32x4xf32, #tpu.memory_space<vmem>>, vector<2x32x4xf32>,
    %cst_20 = arith.constant 0xFF800000 : f32
    %23 = vector.broadcast %cst_20 : f32 to vector<20x8x4xf32>
    %c0_21 = arith.constant 0 : index
    %c0_22 = arith.constant 0 : index
    %c0_23 = arith.constant 0 : index
    %24 = vector.load %arg7[%c0_21, %c0_22, %c0_23] : memref<20x32x4xf32, #tpu.memory_space<vmem>>, vector<20x8x4xf32>
    tpu.vector_store %arg7[%c0_21, %c0_22, %c0_23], %23 {strides = array<i32>} : memref<20x32x4xf32, #tpu.memory_space<vmem>>, vector<20x8x4xf32>,
    %cst_24 = arith.constant 0xFF800000 : f32
    %25 = vector.broadcast %cst_24 : f32 to vector<20x8x4xf32>
    %c0_25 = arith.constant 0 : index
    %c24 = arith.constant 24 : index
    %c0_26 = arith.constant 0 : index
    %26 = vector.load %arg7[%c0_25, %c24, %c0_26] : memref<20x32x4xf32, #tpu.memory_space<vmem>>, vector<20x8x4xf32>
    tpu.vector_store %arg7[%c0_25, %c24, %c0_26], %25 {strides = array<i32>} : memref<20x32x4xf32, #tpu.memory_space<vmem>>, vector<20x8x4xf32>,
    %27 = vector.shape_cast %14 : vector<256x4xf32> to vector<16x16x4xf32>
    %c0_i32 = arith.constant 0 : i32
    %c3_i32 = arith.constant 3 : i32
    %28 = arith.addi %c0_i32, %c3_i32 : i32
    %c1_i32 = arith.constant 1 : i32
    %29:2 = scf.for %arg8 = %c0_i32 to %28 step %c1_i32 iter_args(%arg9 = %18, %arg10 = %27) -> (vector<256x8xf32>, vector<16x16x4xf32>)  : i32 {
      %c2 = arith.constant 2 : index
      %c8 = arith.constant 8 : index
      %c0_36 = arith.constant 0 : index
      %44 = vector.load %arg7[%c2, %c8, %c0_36] : memref<20x32x4xf32, #tpu.memory_space<vmem>>, vector<16x16x4xf32>
      tpu.vector_store %arg7[%c2, %c8, %c0_36], %arg10 {strides = array<i32>} : memref<20x32x4xf32, #tpu.memory_space<vmem>>, vector<16x16x4xf32>,
      %c0_37 = arith.constant 0 : index
      %c0_38 = arith.constant 0 : index
      %c0_39 = arith.constant 0 : index
      %45 = vector.load %arg7[%c0_37, %c0_38, %c0_39] : memref<20x32x4xf32, #tpu.memory_space<vmem>>, vector<20x32x4xf32>
      %46 = vector.shape_cast %45 : vector<20x32x4xf32> to vector<640x4xf32>
      %47 = vector.extract_strided_slice %46 {offsets = [0, 0], sizes = [512, 4], strides = [1, 1]} : vector<640x4xf32> to vector<512x4xf32>
      %48 = vector.extract_strided_slice %46 {offsets = [32, 0], sizes = [512, 4], strides = [1, 1]} : vector<640x4xf32> to vector<512x4xf32>
      %49 = arith.maximumf %47, %48 : vector<512x4xf32>
      %50 = vector.extract_strided_slice %46 {offsets = [64, 0], sizes = [512, 4], strides = [1, 1]} : vector<640x4xf32> to vector<512x4xf32>
      %51 = arith.maximumf %49, %50 : vector<512x4xf32>
      %52 = vector.extract_strided_slice %46 {offsets = [96, 0], sizes = [512, 4], strides = [1, 1]} : vector<640x4xf32> to vector<512x4xf32>
      %53 = arith.maximumf %51, %52 : vector<512x4xf32>
      %54 = vector.extract_strided_slice %46 {offsets = [128, 0], sizes = [512, 4], strides = [1, 1]} : vector<640x4xf32> to vector<512x4xf32>
      %55 = arith.maximumf %53, %54 : vector<512x4xf32>
      %c2_i32 = arith.constant 2 : i32
      %56 = tpu.dynamic_rotate %55 by %c2_i32 dim 0 : vector<512x4xf32>, i32 -> vector<512x4xf32>
      %57 = arith.maximumf %55, %56 : vector<512x4xf32>
      %c1_i32_40 = arith.constant 1 : i32
      %58 = tpu.dynamic_rotate %55 by %c1_i32_40 dim 0 : vector<512x4xf32>, i32 -> vector<512x4xf32>
      %59 = arith.maximumf %57, %58 : vector<512x4xf32>
      %c511_i32 = arith.constant 511 : i32
      %60 = tpu.dynamic_rotate %55 by %c511_i32 dim 0 : vector<512x4xf32>, i32 -> vector<512x4xf32>
      %61 = arith.maximumf %59, %60 : vector<512x4xf32>
      %c510_i32 = arith.constant 510 : i32
      %62 = tpu.dynamic_rotate %55 by %c510_i32 dim 0 : vector<512x4xf32>, i32 -> vector<512x4xf32>
      %63 = arith.maximumf %61, %62 : vector<512x4xf32>
      %64 = vector.shape_cast %63 : vector<512x4xf32> to vector<16x32x4xf32>
      %65 = vector.extract_strided_slice %64 {offsets = [0, 8, 0], sizes = [16, 16, 4], strides = [1, 1, 1]} : vector<16x32x4xf32> to vector<16x16x4xf32>
      %c1_i32_41 = arith.constant 1 : i32
      %66 = arith.addi %arg8, %c1_i32_41 : i32
      %67 = arith.index_cast %66 : i32 to index
      %c0_42 = arith.constant 0 : index
      %c0_43 = arith.constant 0 : index
      %68 = vector.load %arg4[%67, %c0_42, %c0_43] : memref<4x4x8xbf16, #tpu.memory_space<vmem>>, vector<1x4x8xbf16>
      %69 = vector.shape_cast %68 : vector<1x4x8xbf16> to vector<4x8xbf16>
      %70 = vector.shape_cast %65 : vector<16x16x4xf32> to vector<256x4xf32>
      %71 = arith.truncf %70 : vector<256x4xf32> to vector<256x4xbf16>
      %cst_44 = arith.constant dense<0.000000e+00> : vector<256x8xf32>
      %72 = tpu.matmul %71, %69, %cst_44 {dimension_numbers = #tpu.dot_dimension_numbers<[1], [0], [0], [1], [0, 0, 1, 1], [], []>} : vector<256x4xbf16>, vector<4x8xbf16>, vector<256x8xf32> -> vector<256x8xf32>
      %73 = arith.addf %arg9, %72 : vector<256x8xf32>
      scf.yield %73, %65 : vector<256x8xf32>, vector<16x16x4xf32>
    }
    %c3_i32_27 = arith.constant 3 : i32
    %c0_28 = arith.constant 0 : index
    %c0_29 = arith.constant 0 : index
    %30 = vector.load %arg5[%c0_28, %c0_29] : memref<1x8xf32, #tpu.memory_space<vmem>>, vector<1x8xf32>
    %31 = vector.broadcast %30 : vector<1x8xf32> to vector<256x8xf32>
    %32 = arith.addf %29#0, %31 : vector<256x8xf32>
    %cst_30 = arith.constant 0.000000e+00 : f32
    %33 = vector.broadcast %cst_30 : f32 to vector<256x8xf32>
    %34 = arith.subf %33, %32 : vector<256x8xf32>
    %35 = math.exp %34 : vector<256x8xf32>
    %cst_31 = arith.constant 1.000000e+00 : f32
    %36 = vector.broadcast %cst_31 : f32 to vector<256x8xf32>
    %37 = arith.addf %36, %35 : vector<256x8xf32>
    %38 = tpu.reciprocal %37 {approx = true} : vector<256x8xf32> -> vector<256x8xf32>
    %39 = arith.mulf %32, %38 : vector<256x8xf32>
    %40 = vector.shape_cast %39 : vector<256x8xf32> to vector<16x16x8xf32>
    %c0_32 = arith.constant 0 : index
    %c0_33 = arith.constant 0 : index
    %c0_34 = arith.constant 0 : index
    %c0_35 = arith.constant 0 : index
    %41 = vector.load %arg6[%c0_32, %c0_33, %c0_34, %c0_35] : memref<1x16x16x8xf32, #tpu.memory_space<vmem>>, vector<1x16x16x8xf32>
    %42 = vector.shape_cast %41 : vector<1x16x16x8xf32> to vector<16x16x8xf32>
    %43 = vector.shape_cast %40 : vector<16x16x8xf32> to vector<1x16x16x8xf32>
    tpu.vector_store %arg6[%c0_32, %c0_33, %c0_34, %c0_35], %43 {strides = array<i32>} : memref<1x16x16x8xf32, #tpu.memory_space<vmem>>, vector<1x16x16x8xf32>,
    return
  }
  func.func @transform_0(%arg0: i32) -> (i32, i32, i32, i32) {
    %c0_i32 = arith.constant 0 : i32
    %c0_i32_0 = arith.constant 0 : i32
    %c0_i32_1 = arith.constant 0 : i32
    %c0_i32_2 = arith.constant 0 : i32
    return %arg0, %c0_i32, %c0_i32_0, %c0_i32_1 : i32, i32, i32, i32
  }
  func.func @transform_1(%arg0: i32) -> (i32, i32) {
    %c0_i32 = arith.constant 0 : i32
    %c0_i32_0 = arith.constant 0 : i32
    %c0_i32_1 = arith.constant 0 : i32
    return %c0_i32, %c0_i32_0 : i32, i32
  }
  func.func @transform_2(%arg0: i32) -> (i32, i32) {
    %c0_i32 = arith.constant 0 : i32
    %c0_i32_0 = arith.constant 0 : i32
    %c0_i32_1 = arith.constant 0 : i32
    return %c0_i32, %c0_i32_0 : i32, i32
  }
  func.func @transform_3(%arg0: i32) -> (i32, i32, i32) {
    %c0_i32 = arith.constant 0 : i32
    %c0_i32_0 = arith.constant 0 : i32
    %c0_i32_1 = arith.constant 0 : i32
    %c0_i32_2 = arith.constant 0 : i32
    return %c0_i32, %c0_i32_0, %c0_i32_1 : i32, i32, i32
  }
  func.func @transform_4(%arg0: i32) -> (i32, i32) {
    %c0_i32 = arith.constant 0 : i32
    %c0_i32_0 = arith.constant 0 : i32
    %c0_i32_1 = arith.constant 0 : i32
    return %c0_i32, %c0_i32_0 : i32, i32
  }
  func.func @transform_5(%arg0: i32) -> (i32, i32, i32, i32) {
    %c0_i32 = arith.constant 0 : i32
    %c0_i32_0 = arith.constant 0 : i32
    %c0_i32_1 = arith.constant 0 : i32
    %c0_i32_2 = arith.constant 0 : i32
    return %arg0, %c0_i32, %c0_i32_0, %c0_i32_1 : i32, i32, i32, i32
  }
}

</mosaic_0001>

<llo_original>
// kernel: tpu_custom_call.1
$region0: #{tpu_custom_call.1}
  #allocation0 [shape = 'u32[]', space=smem, size = 0x4, offset = 0x4, fixed_abs, tag = 'smem constant byte address 0x4 - core index']
  #allocation1 [shape = 'u32[72,128]{1,0:T(1,128)}', space=vmem, size = 0x9000, scoped, tag = 'internal scratch']
  #allocation2 [shape = 'f32[20,32,4]{2,1,0:T(8,128)}', space=vmem, size = 0x50000, scoped, tag = 'scratch operand']
  %s0 = inlined_call_operand.vmem [shape: bf16[2,16,16,8], index: 0, kind: input, shape index: {}]
  %s1 = inlined_call_operand.vmem [shape: bf16[8,4], index: 1, kind: input, shape index: {}]
  %s2 = inlined_call_operand.vmem [shape: f32[1,4], index: 2, kind: input, shape index: {}]
  %s3 = inlined_call_operand.vmem [shape: bf16[4,4,8], index: 3, kind: input, shape index: {}]
  %s4 = inlined_call_operand.vmem [shape: f32[1,8], index: 4, kind: input, shape index: {}]
  %s5 = inlined_call_operand.vmem [shape: f32[2,16,16,8], index: 5, kind: output, shape index: {}]
  %s6 = sld [smem:[#allocation0]]
  $region60: #{tpu_custom_call.1} parent=0
    _
  %s8 = ssub.s32 1, %s6
  %s9 = scalar_select 0, %s8, %s6
  loop: start=0, step=1, limit=4
  $region2: #{tpu_custom_call.1} parent=0 // loop_pre_header
    _
  $region3: #{tpu_custom_call.1} parent=0 // loop_header
    %s11 = sphi 0, %s15
    %p12 = scmp.ge.s32.totalorder %s11, 4
    %s21 = sphi 0, %s23
    %s24 = sphi 0, %s21
    %s25 = sphi 0, %s24
    %s41 = sphi 0, %s25
    %s45 = sphi 0, %s45
    %s47 = sphi 0, %s45
    %s48 = sphi 0, %s47
    %s62 = sphi 0, %s48
    %s66 = sphi 0, %s66
    %s68 = sphi 0, %s66
    %s69 = sphi 0, %s68
    %s83 = sphi 0, %s69
    %s87 = sphi 0, %s87
    %s89 = sphi 0, %s87
    %s90 = sphi 0, %s89
    %s104 = sphi 0, %s90
    %s108 = sphi 0, %s108
    %s110 = sphi 0, %s108
    %s111 = sphi 0, %s110
    %s125 = sphi 0, %s111
    %s131 = sphi 0, %s133
    %s134 = sphi 0, %s131
    %s135 = sphi 0, %s134
    %s151 = sphi 0, %s135
  $region4: #{tpu_custom_call.1} parent=0 // loop_header_branch
    %14 = sbr.rel (%p12) target = $region8
  $region5: #{tpu_custom_call.1} parent=0 // loop_body
    %s16 = ssub.s32 %s11, 1
    %s17 = ssub.s32 %s11, 2
    %s18 = sadd.s32 %s11, 1
    %s19 = ssub.s32 %s11, %s18
    %p20 = scmp.eq.s32.totalorder %s19, 0
    %s22 = sadd.s32 %s21, 1
    %s23 = scalar_select %p20, %s21, %s22
    %p26 = pneg %p20
    %p27 = scmp.eq.s32.totalorder %s11, 1
    %p28 = por %p26, %p27
    %p29 = scmp.ne.s32.totalorder %s21, %s24
    %p30 = scmp.eq.s32.totalorder %s11, 0
    %p31 = por %p29, %p30
    %p32 = scmp.ne.s32.totalorder %s21, %s24
    %p33 = scmp.eq.s32.totalorder %s16, 1
    %p34 = por %p32, %p33
    %p35 = scmp.ne.s32.totalorder %s24, %s25
    %p36 = scmp.eq.s32.totalorder %s16, 0
    %p37 = por %p35, %p36
    %p38 = scmp.ne.s32.totalorder %s24, %s25
    %p39 = scmp.eq.s32.totalorder %s17, 1
    %p40 = por %p38, %p39
    %p42 = scmp.ne.s32.totalorder %s25, %s41
    %p43 = scmp.eq.s32.totalorder %s17, 0
    %p44 = por %p42, %p43
    %s46 = sadd.s32 %s45, 1
    %p49 = scmp.eq.s32.totalorder %s11, 1
    %p50 = scmp.ne.s32.totalorder %s45, %s47
    %p51 = scmp.eq.s32.totalorder %s11, 0
    %p52 = por %p50, %p51
    %p53 = scmp.ne.s32.totalorder %s45, %s47
    %p54 = scmp.eq.s32.totalorder %s16, 1
    %p55 = por %p53, %p54
    %p56 = scmp.ne.s32.totalorder %s47, %s48
    %p57 = scmp.eq.s32.totalorder %s16, 0
    %p58 = por %p56, %p57
    %p59 = scmp.ne.s32.totalorder %s47, %s48
    %p60 = scmp.eq.s32.totalorder %s17, 1
    %p61 = por %p59, %p60
    %p63 = scmp.ne.s32.totalorder %s48, %s62
    %p64 = scmp.eq.s32.totalorder %s17, 0
    %p65 = por %p63, %p64
    %s67 = sadd.s32 %s66, 1
    %p70 = scmp.eq.s32.totalorder %s11, 1
    %p71 = scmp.ne.s32.totalorder %s66, %s68
    %p72 = scmp.eq.s32.totalorder %s11, 0
    %p73 = por %p71, %p72
    %p74 = scmp.ne.s32.totalorder %s66, %s68
    %p75 = scmp.eq.s32.totalorder %s16, 1
    %p76 = por %p74, %p75
    %p77 = scmp.ne.s32.totalorder %s68, %s69
    %p78 = scmp.eq.s32.totalorder %s16, 0
    %p79 = por %p77, %p78
    %p80 = scmp.ne.s32.totalorder %s68, %s69
    %p81 = scmp.eq.s32.totalorder %s17, 1
    %p82 = por %p80, %p81
    %p84 = scmp.ne.s32.totalorder %s69, %s83
    %p85 = scmp.eq.s32.totalorder %s17, 0
    %p86 = por %p84, %p85
    %s88 = sadd.s32 %s87, 1
    %p91 = scmp.eq.s32.totalorder %s11, 1
    %p92 = scmp.ne.s32.totalorder %s87, %s89
    %p93 = scmp.eq.s32.totalorder %s11, 0
    %p94 = por %p92, %p93
    %p95 = scmp.ne.s32.totalorder %s87, %s89
    %p96 = scmp.eq.s32.totalorder %s16, 1
    %p97 = por %p95, %p96
    %p98 = scmp.ne.s32.totalorder %s89, %s90
    %p99 = scmp.eq.s32.totalorder %s16, 0
    %p100 = por %p98, %p99
    %p101 = scmp.ne.s32.totalorder %s89, %s90
    %p102 = scmp.eq.s32.totalorder %s17, 1
    %p103 = por %p101, %p102
    %p105 = scmp.ne.s32.totalorder %s90, %s104
    %p106 = scmp.eq.s32.totalorder %s17, 0
    %p107 = por %p105, %p106
    %s109 = sadd.s32 %s108, 1
    %p112 = scmp.eq.s32.totalorder %s11, 1
    %p113 = scmp.ne.s32.totalorder %s108, %s110
    %p114 = scmp.eq.s32.totalorder %s11, 0
    %p115 = por %p113, %p114
    %p116 = scmp.ne.s32.totalorder %s108, %s110
    %p117 = scmp.eq.s32.totalorder %s16, 1
    %p118 = por %p116, %p117
    %p119 = scmp.ne.s32.totalorder %s110, %s111
    %p120 = scmp.eq.s32.totalorder %s16, 0
    %p121 = por %p119, %p120
    %p122 = scmp.ne.s32.totalorder %s110, %s111
    %p123 = scmp.eq.s32.totalorder %s17, 1
    %p124 = por %p122, %p123
    %p126 = scmp.ne.s32.totalorder %s111, %s125
    %p127 = scmp.eq.s32.totalorder %s17, 0
    %p128 = por %p126, %p127
    %s129 = ssub.s32 %s11, %s18
    %p130 = scmp.eq.s32.totalorder %s129, 0
    %s132 = sadd.s32 %s131, 1
    %s133 = scalar_select %p130, %s131, %s132
    %p136 = pneg %p130
    %p137 = scmp.eq.s32.totalorder %s11, 1
    %p138 = por %p136, %p137
    %p139 = scmp.ne.s32.totalorder %s131, %s134
    %p140 = scmp.eq.s32.totalorder %s11, 0
    %p141 = por %p139, %p140
    %p142 = scmp.ne.s32.totalorder %s131, %s134
    %p143 = scmp.eq.s32.totalorder %s16, 1
    %p144 = por %p142, %p143
    %p145 = scmp.ne.s32.totalorder %s134, %s135
    %p146 = scmp.eq.s32.totalorder %s16, 0
    %p147 = por %p145, %p146
    %p148 = scmp.ne.s32.totalorder %s134, %s135
    %p149 = scmp.eq.s32.totalorder %s17, 1
    %p150 = por %p148, %p149
    %p152 = scmp.ne.s32.totalorder %s135, %s151
    %p153 = scmp.eq.s32.totalorder %s17, 0
    %p154 = por %p152, %p153
    %p155 = scmp.le.s32.totalorder 1, %s11
    %p156 = scmp.lt.s32.totalorder %s11, 3
    %p157 = pnand %p155, %p156
    %p158 = pneg %p157
    // Predicated region
    $region9: #{tpu_custom_call.1} parent=5 // pred_check
      _
    $region10: #{tpu_custom_call.1} parent=5 // pred_check_branch
      %160 = sbr.rel (%p157) target = $region12
    $region11: #{tpu_custom_call.1} parent=5 // pred_region
      %s161 = ssub.s32 %s11, 1
      // Predicated region
      $region13: #{tpu_custom_call.1} parent=11 // pred_check
        %p162 = pneg %p58
      $region14: #{tpu_custom_call.1} parent=11 // pred_check_branch
        %164 = sbr.rel (%p162) target = $region16
      $region15: #{tpu_custom_call.1} parent=11 // pred_region
        _
      $region16: #{tpu_custom_call.1} parent=11 // pred_fallthru
        _
      // Predicated region
      $region17: #{tpu_custom_call.1} parent=11 // pred_check
        %p165 = pneg %p79
      $region18: #{tpu_custom_call.1} parent=11 // pred_check_branch
        %167 = sbr.rel (%p165) target = $region20
      $region19: #{tpu_custom_call.1} parent=11 // pred_region
        _
      $region20: #{tpu_custom_call.1} parent=11 // pred_fallthru
        _
      // Predicated region
      $region21: #{tpu_custom_call.1} parent=11 // pred_check
        %p168 = pneg %p100
      $region22: #{tpu_custom_call.1} parent=11 // pred_check_branch
        %170 = sbr.rel (%p168) target = $region24
      $region23: #{tpu_custom_call.1} parent=11 // pred_region
        _
      $region24: #{tpu_custom_call.1} parent=11 // pred_fallthru
        _
      // Predicated region
      $region25: #{tpu_custom_call.1} parent=11 // pred_check
        %p171 = pneg %p121
      $region26: #{tpu_custom_call.1} parent=11 // pred_check_branch
        %173 = sbr.rel (%p171) target = $region28
      $region27: #{tpu_custom_call.1} parent=11 // pred_region
        _
      $region28: #{tpu_custom_call.1} parent=11 // pred_fallthru
        _
    $region12: #{tpu_custom_call.1} parent=5 // pred_fallthru
      _
    %p174 = scmp.lt.s32.totalorder %s11, 2
    // Predicated region
    $region29: #{tpu_custom_call.1} parent=5 // pred_check
      %p175 = pneg %p174
    $region30: #{tpu_custom_call.1} parent=5 // pred_check_branch
      %177 = sbr.rel (%p175) target = $region32
    $region31: #{tpu_custom_call.1} parent=5 // pred_region
      // Predicated region
      $region33: #{tpu_custom_call.1} parent=31 // pred_check
        %p178 = pneg %p31
      $region34: #{tpu_custom_call.1} parent=31 // pred_check_branch
        %180 = sbr.rel (%p178) target = $region36
      $region35: #{tpu_custom_call.1} parent=31 // pred_region
        %p181 = scmp.lt.s32.totalorder %s11, 1
        %s182 = scalar_select %p181, %s11, 1
        %s183 = smul.addr %s182, 32
        %s184 = smul.addr %s183, 4
        %s185 = scalar_lea.vmem %s0, %s184
      $region36: #{tpu_custom_call.1} parent=31 // pred_fallthru
        _
    $region32: #{tpu_custom_call.1} parent=5 // pred_fallthru
      _
    %p186 = scmp.le.s32.totalorder 1, %s11
    %p187 = scmp.lt.s32.totalorder %s11, 3
    %p188 = pnand %p186, %p187
    %p189 = pneg %p188
    // Predicated region
    $region37: #{tpu_custom_call.1} parent=5 // pred_check
      _
    $region38: #{tpu_custom_call.1} parent=5 // pred_check_branch
      %191 = sbr.rel (%p188) target = $region40
    $region39: #{tpu_custom_call.1} parent=5 // pred_region
      %s192 = ssub.s32 %s11, 1
      %p193 = scmp.lt.s32.totalorder %s16, 1
      %s194 = scalar_select %p193, %s16, 1
      %s195 = smul.addr %s194, 32
      %s196 = smul.addr %s195, 4
      %s197 = scalar_lea.vmem %s0, %s196
      %p198 = pneg %p37
      %p199 = pneg %p34
      %p200 = pneg %p58
      %p201 = pneg %p55
      %p202 = pneg %p79
      %p203 = pneg %p76
      %p204 = pneg %p100
      %p205 = pneg %p97
      %p206 = pneg %p121
      %p207 = pneg %p118
      %p208 = pneg %p147
      %p209 = pneg %p144
      %p210 = scmp.lt.s32.totalorder %s16, 1
      %s211 = scalar_select %p210, %s16, 1
      %s212 = smul.addr %s211, 32
      %s213 = smul.addr %s212, 8
      %s214 = scalar_lea.vmem %s5, %s213
      %p215 = scmp.lt.s32.totalorder %s16, 1
      %s216 = scalar_select %p215, %s16, 1
      %s217 = smul.addr %s216, 32
      %s218 = smul.addr %s217, 4
      %s219 = scalar_lea.vmem %s0, %s218
      %p220 = scmp.lt.s32.totalorder %s16, 1
      %s221 = scalar_select %p220, %s16, 1
      %s222 = smul.addr %s221, 32
      %s223 = smul.addr %s222, 8
      %s224 = scalar_lea.vmem %s5, %s223
      %v226 = vld [vmem:[%s219] sm:$0xf]
      %v227 = vld [vmem:[%s219 + $0x4] sm:$0xf]
      %v228 = vld [vmem:[%s219 + $0x8] sm:$0xf]
      %v229 = vld [vmem:[%s219 + $0xc] sm:$0xf]
      %v230 = vld [vmem:[%s219 + $0x10] sm:$0xf]
      %v231 = vld [vmem:[%s219 + $0x14] sm:$0xf]
      %v232 = vld [vmem:[%s219 + $0x18] sm:$0xf]
      %v233 = vld [vmem:[%s219 + $0x1c] sm:$0xf]
      %v234 = vld [vmem:[%s219 + $0x20] sm:$0xf]
      %v235 = vld [vmem:[%s219 + $0x24] sm:$0xf]
      %v236 = vld [vmem:[%s219 + $0x28] sm:$0xf]
      %v237 = vld [vmem:[%s219 + $0x2c] sm:$0xf]
      %v238 = vld [vmem:[%s219 + $0x30] sm:$0xf]
      %v239 = vld [vmem:[%s219 + $0x34] sm:$0xf]
      %v240 = vld [vmem:[%s219 + $0x38] sm:$0xf]
      %v241 = vld [vmem:[%s219 + $0x3c] sm:$0xf]
      %v242 = vld [vmem:[%s219 + $0x40] sm:$0xf]
      %v243 = vld [vmem:[%s219 + $0x44] sm:$0xf]
      %v244 = vld [vmem:[%s219 + $0x48] sm:$0xf]
      %v245 = vld [vmem:[%s219 + $0x4c] sm:$0xf]
      %v246 = vld [vmem:[%s219 + $0x50] sm:$0xf]
      %v247 = vld [vmem:[%s219 + $0x54] sm:$0xf]
      %v248 = vld [vmem:[%s219 + $0x58] sm:$0xf]
      %v249 = vld [vmem:[%s219 + $0x5c] sm:$0xf]
      %v250 = vld [vmem:[%s219 + $0x60] sm:$0xf]
      %v251 = vld [vmem:[%s219 + $0x64] sm:$0xf]
      %v252 = vld [vmem:[%s219 + $0x68] sm:$0xf]
      %v253 = vld [vmem:[%s219 + $0x6c] sm:$0xf]
      %v254 = vld [vmem:[%s219 + $0x70] sm:$0xf]
      %v255 = vld [vmem:[%s219 + $0x74] sm:$0xf]
      %v256 = vld [vmem:[%s219 + $0x78] sm:$0xf]
      %v257 = vld [vmem:[%s219 + $0x7c] sm:$0xf]
      %v258 = vld [vmem:[%s1] sm:$0xf]
      %v259 = vld [vmem:[%s2] sm:$0x1]
      %v261 = vperm.slane %v259, 0
      %v295 = vunpack.c.l.b16 %v226
      %v296 = vunpack.c.l.b16 %v227
      %v297 = vunpack.c.l.b16 %v228
      %v298 = vunpack.c.l.b16 %v229
      %v299 = vunpack.c.l.b16 %v230
      %v300 = vunpack.c.l.b16 %v231
      %v301 = vunpack.c.l.b16 %v232
      %v302 = vunpack.c.l.b16 %v233
      %v303 = vunpack.c.l.b16 %v234
      %v304 = vunpack.c.l.b16 %v235
      %v305 = vunpack.c.l.b16 %v236
      %v306 = vunpack.c.l.b16 %v237
      %v307 = vunpack.c.l.b16 %v238
      %v308 = vunpack.c.l.b16 %v239
      %v309 = vunpack.c.l.b16 %v240
      %v310 = vunpack.c.l.b16 %v241
      %v311 = vunpack.c.l.b16 %v242
      %v312 = vunpack.c.l.b16 %v243
      %v313 = vunpack.c.l.b16 %v244
      %v314 = vunpack.c.l.b16 %v245
      %v315 = vunpack.c.l.b16 %v246
      %v316 = vunpack.c.l.b16 %v247
      %v317 = vunpack.c.l.b16 %v248
      %v318 = vunpack.c.l.b16 %v249
      %v319 = vunpack.c.l.b16 %v250
      %v320 = vunpack.c.l.b16 %v251
      %v321 = vunpack.c.l.b16 %v252
      %v322 = vunpack.c.l.b16 %v253
      %v323 = vunpack.c.l.b16 %v254
      %v324 = vunpack.c.l.b16 %v255
      %v325 = vunpack.c.l.b16 %v256
      %v326 = vunpack.c.l.b16 %v257
      %v327 = vpack.c.b16 %v296, %v295
      %v328 = vpack.c.b16 %v298, %v297
      %v329 = vpack.c.b16 %v300, %v299
      %v330 = vpack.c.b16 %v302, %v301
      %v331 = vpack.c.b16 %v304, %v303
      %v332 = vpack.c.b16 %v306, %v305
      %v333 = vpack.c.b16 %v308, %v307
      %v334 = vpack.c.b16 %v310, %v309
      %v335 = vpack.c.b16 %v312, %v311
      %v336 = vpack.c.b16 %v314, %v313
      %v337 = vpack.c.b16 %v316, %v315
      %v338 = vpack.c.b16 %v318, %v317
      %v339 = vpack.c.b16 %v320, %v319
      %v340 = vpack.c.b16 %v322, %v321
      %v341 = vpack.c.b16 %v324, %v323
      %v342 = vpack.c.b16 %v326, %v325
      %vm343 = vcmask 64512
      %v345 = vsel %vm343, %v327, 0
      %v348 = vsel %vm343, %v328, 0
      %v351 = vsel %vm343, %v329, 0
      %v354 = vsel %vm343, %v330, 0
      %v357 = vsel %vm343, %v331, 0
      %v360 = vsel %vm343, %v332, 0
      %v363 = vsel %vm343, %v333, 0
      %v366 = vsel %vm343, %v334, 0
      %v369 = vsel %vm343, %v335, 0
      %v372 = vsel %vm343, %v336, 0
      %v375 = vsel %vm343, %v337, 0
      %v378 = vsel %vm343, %v338, 0
      %v381 = vsel %vm343, %v339, 0
      %v384 = vsel %vm343, %v340, 0
      %v387 = vsel %vm343, %v341, 0
      %v390 = vsel %vm343, %v342, 0
      %vm392 = vcmask 1043456
      %v394 = vsel %vm392, %v258, 0
      %396 = vmatpush.bf16.msra.mxu0 0
      %397 = vmatpush.bf16.msra.mxu0 0
      %398 = vmatpush.bf16.msra.mxu0 0
      %399 = vmatpush.bf16.msra.mxu0 0
      %400 = vmatpush.bf16.msra.mxu0 0
      %401 = vmatpush.bf16.msra.mxu0 0
      %402 = vmatpush.bf16.msra.mxu0 0
      %403 = vmatpush.bf16.msra.mxu0 %v394
      %404 = vmatmul.bf16.gmra.mxu0 %v345
      %v405 = vpop.f32.mrf.mxu0
      %v406 = vadd.f32 %v261, %v405
      %v407 = vpop.f32.mrf.mxu0
      %v408 = vadd.f32 %v261, %v407
      %409 = vmatmul.bf16.gmra.mxu0 %v348
      %v410 = vpop.f32.mrf.mxu0
      %v411 = vadd.f32 %v261, %v410
      %v412 = vpop.f32.mrf.mxu0
      %v413 = vadd.f32 %v261, %v412
      %414 = vmatmul.bf16.gmra.mxu0 %v351
      %v415 = vpop.f32.mrf.mxu0
      %v416 = vadd.f32 %v261, %v415
      %v417 = vpop.f32.mrf.mxu0
      %v418 = vadd.f32 %v261, %v417
      %419 = vmatmul.bf16.gmra.mxu0 %v354
      %v420 = vpop.f32.mrf.mxu0
      %v421 = vadd.f32 %v261, %v420
      %v422 = vpop.f32.mrf.mxu0
      %v423 = vadd.f32 %v261, %v422
      %424 = vmatmul.bf16.gmra.mxu0 %v357
      %v425 = vpop.f32.mrf.mxu0
      %v426 = vadd.f32 %v261, %v425
      %v427 = vpop.f32.mrf.mxu0
      %v428 = vadd.f32 %v261, %v427
      %429 = vmatmul.bf16.gmra.mxu0 %v360
      %v430 = vpop.f32.mrf.mxu0
      %v431 = vadd.f32 %v261, %v430
      %v432 = vpop.f32.mrf.mxu0
      %v433 = vadd.f32 %v261, %v432
      %434 = vmatmul.bf16.gmra.mxu0 %v363
      %v435 = vpop.f32.mrf.mxu0
      %v436 = vadd.f32 %v261, %v435
      %v437 = vpop.f32.mrf.mxu0
      %v438 = vadd.f32 %v261, %v437
      %439 = vmatmul.bf16.gmra.mxu0 %v366
      %v440 = vpop.f32.mrf.mxu0
      %v441 = vadd.f32 %v261, %v440
      %v442 = vpop.f32.mrf.mxu0
      %v443 = vadd.f32 %v261, %v442
      %444 = vmatmul.bf16.gmra.mxu0 %v369
      %v445 = vpop.f32.mrf.mxu0
      %v446 = vadd.f32 %v261, %v445
      %v447 = vpop.f32.mrf.mxu0
      %v448 = vadd.f32 %v261, %v447
      %449 = vmatmul.bf16.gmra.mxu0 %v372
      %v450 = vpop.f32.mrf.mxu0
      %v451 = vadd.f32 %v261, %v450
      %v452 = vpop.f32.mrf.mxu0
      %v453 = vadd.f32 %v261, %v452
      %454 = vmatmul.bf16.gmra.mxu0 %v375
      %v455 = vpop.f32.mrf.mxu0
      %v456 = vadd.f32 %v261, %v455
      %v457 = vpop.f32.mrf.mxu0
      %v458 = vadd.f32 %v261, %v457
      %459 = vmatmul.bf16.gmra.mxu0 %v378
      %v460 = vpop.f32.mrf.mxu0
      %v461 = vadd.f32 %v261, %v460
      %v462 = vpop.f32.mrf.mxu0
      %v463 = vadd.f32 %v261, %v462
      %464 = vmatmul.bf16.gmra.mxu0 %v381
      %v465 = vpop.f32.mrf.mxu0
      %v466 = vadd.f32 %v261, %v465
      %v467 = vpop.f32.mrf.mxu0
      %v468 = vadd.f32 %v261, %v467
      %469 = vmatmul.bf16.gmra.mxu0 %v384
      %v470 = vpop.f32.mrf.mxu0
      %v471 = vadd.f32 %v261, %v470
      %v472 = vpop.f32.mrf.mxu0
      %v473 = vadd.f32 %v261, %v472
      %474 = vmatmul.bf16.gmra.mxu0 %v387
      %v475 = vpop.f32.mrf.mxu0
      %v476 = vadd.f32 %v261, %v475
      %v477 = vpop.f32.mrf.mxu0
      %v478 = vadd.f32 %v261, %v477
      %479 = vmatmul.bf16.gmra.mxu0 %v390
      %v480 = vpop.f32.mrf.mxu0
      %v481 = vadd.f32 %v261, %v480
      %v482 = vpop.f32.mrf.mxu0
      %v483 = vadd.f32 %v261, %v482
      %484 = vdwg.mxu0
      %v485 = vsub.f32 0.0, %v406
      %v486 = vsub.f32 0.0, %v408
      %v487 = vsub.f32 0.0, %v411
      %v488 = vsub.f32 0.0, %v413
      %v489 = vsub.f32 0.0, %v416
      %v490 = vsub.f32 0.0, %v418
      %v491 = vsub.f32 0.0, %v421
      %v492 = vsub.f32 0.0, %v423
      %v493 = vsub.f32 0.0, %v426
      %v494 = vsub.f32 0.0, %v428
      %v495 = vsub.f32 0.0, %v431
      %v496 = vsub.f32 0.0, %v433
      %v497 = vsub.f32 0.0, %v436
      %v498 = vsub.f32 0.0, %v438
      %v499 = vsub.f32 0.0, %v441
      %v500 = vsub.f32 0.0, %v443
      %v501 = vsub.f32 0.0, %v446
      %v502 = vsub.f32 0.0, %v448
      %v503 = vsub.f32 0.0, %v451
      %v504 = vsub.f32 0.0, %v453
      %v505 = vsub.f32 0.0, %v456
      %v506 = vsub.f32 0.0, %v458
      %v507 = vsub.f32 0.0, %v461
      %v508 = vsub.f32 0.0, %v463
      %v509 = vsub.f32 0.0, %v466
      %v510 = vsub.f32 0.0, %v468
      %v511 = vsub.f32 0.0, %v471
      %v512 = vsub.f32 0.0, %v473
      %v513 = vsub.f32 0.0, %v476
      %v514 = vsub.f32 0.0, %v478
      %v515 = vsub.f32 0.0, %v481
      %v516 = vsub.f32 0.0, %v483
      %v517 = vmul.f32 %v485, 1.442695
      %v518 = vpow.pop %v517
      %v519 = vmul.f32 %v486, 1.442695
      %v520 = vpow.pop %v519
      %v521 = vmul.f32 %v487, 1.442695
      %v522 = vpow.pop %v521
      %v523 = vmul.f32 %v488, 1.442695
      %v524 = vpow.pop %v523
      %v525 = vmul.f32 %v489, 1.442695
      %v526 = vpow.pop %v525
      %v527 = vmul.f32 %v490, 1.442695
      %v528 = vpow.pop %v527
      %v529 = vmul.f32 %v491, 1.442695
      %v530 = vpow.pop %v529
      %v531 = vmul.f32 %v492, 1.442695
      %v532 = vpow.pop %v531
      %v533 = vmul.f32 %v493, 1.442695
      %v534 = vpow.pop %v533
      %v535 = vmul.f32 %v494, 1.442695
      %v536 = vpow.pop %v535
      %v537 = vmul.f32 %v495, 1.442695
      %v538 = vpow.pop %v537
      %v539 = vmul.f32 %v496, 1.442695
      %v540 = vpow.pop %v539
      %v541 = vmul.f32 %v497, 1.442695
      %v542 = vpow.pop %v541
      %v543 = vmul.f32 %v498, 1.442695
      %v544 = vpow.pop %v543
      %v545 = vmul.f32 %v499, 1.442695
      %v546 = vpow.pop %v545
      %v547 = vmul.f32 %v500, 1.442695
      %v548 = vpow.pop %v547
      %v549 = vmul.f32 %v501, 1.442695
      %v550 = vpow.pop %v549
      %v551 = vmul.f32 %v502, 1.442695
      %v552 = vpow.pop %v551
      %v553 = vmul.f32 %v503, 1.442695
      %v554 = vpow.pop %v553
      %v555 = vmul.f32 %v504, 1.442695
      %v556 = vpow.pop %v555
      %v557 = vmul.f32 %v505, 1.442695
      %v558 = vpow.pop %v557
      %v559 = vmul.f32 %v506, 1.442695
      %v560 = vpow.pop %v559
      %v561 = vmul.f32 %v507, 1.442695
      %v562 = vpow.pop %v561
      %v563 = vmul.f32 %v508, 1.442695
      %v564 = vpow.pop %v563
      %v565 = vmul.f32 %v509, 1.442695
      %v566 = vpow.pop %v565
      %v567 = vmul.f32 %v510, 1.442695
      %v568 = vpow.pop %v567
      %v569 = vmul.f32 %v511, 1.442695
      %v570 = vpow.pop %v569
      %v571 = vmul.f32 %v512, 1.442695
      %v572 = vpow.pop %v571
      %v573 = vmul.f32 %v513, 1.442695
      %v574 = vpow.pop %v573
      %v575 = vmul.f32 %v514, 1.442695
      %v576 = vpow.pop %v575
      %v577 = vmul.f32 %v515, 1.442695
      %v578 = vpow.pop %v577
      %v579 = vmul.f32 %v516, 1.442695
      %v580 = vpow.pop %v579
      %v581 = vadd.f32 %v518, 1.0
      %v582 = vadd.f32 %v520, 1.0
      %v583 = vadd.f32 %v522, 1.0
      %v584 = vadd.f32 %v524, 1.0
      %v585 = vadd.f32 %v526, 1.0
      %v586 = vadd.f32 %v528, 1.0
      %v587 = vadd.f32 %v530, 1.0
      %v588 = vadd.f32 %v532, 1.0
      %v589 = vadd.f32 %v534, 1.0
      %v590 = vadd.f32 %v536, 1.0
      %v591 = vadd.f32 %v538, 1.0
      %v592 = vadd.f32 %v540, 1.0
      %v593 = vadd.f32 %v542, 1.0
      %v594 = vadd.f32 %v544, 1.0
      %v595 = vadd.f32 %v546, 1.0
      %v596 = vadd.f32 %v548, 1.0
      %v597 = vadd.f32 %v550, 1.0
      %v598 = vadd.f32 %v552, 1.0
      %v599 = vadd.f32 %v554, 1.0
      %v600 = vadd.f32 %v556, 1.0
      %v601 = vadd.f32 %v558, 1.0
      %v602 = vadd.f32 %v560, 1.0
      %v603 = vadd.f32 %v562, 1.0
      %v604 = vadd.f32 %v564, 1.0
      %v605 = vadd.f32 %v566, 1.0
      %v606 = vadd.f32 %v568, 1.0
      %v607 = vadd.f32 %v570, 1.0
      %v608 = vadd.f32 %v572, 1.0
      %v609 = vadd.f32 %v574, 1.0
      %v610 = vadd.f32 %v576, 1.0
      %v611 = vadd.f32 %v578, 1.0
      %v612 = vadd.f32 %v580, 1.0
      %v613 = vrcp.pop %v581
      %v614 = vrcp.pop %v582
      %v615 = vrcp.pop %v583
      %v616 = vrcp.pop %v584
      %v617 = vrcp.pop %v585
      %v618 = vrcp.pop %v586
      %v619 = vrcp.pop %v587
      %v620 = vrcp.pop %v588
      %v621 = vrcp.pop %v589
      %v622 = vrcp.pop %v590
      %v623 = vrcp.pop %v591
      %v624 = vrcp.pop %v592
      %v625 = vrcp.pop %v593
      %v626 = vrcp.pop %v594
      %v627 = vrcp.pop %v595
      %v628 = vrcp.pop %v596
      %v629 = vrcp.pop %v597
      %v630 = vrcp.pop %v598
      %v631 = vrcp.pop %v599
      %v632 = vrcp.pop %v600
      %v633 = vrcp.pop %v601
      %v634 = vrcp.pop %v602
      %v635 = vrcp.pop %v603
      %v636 = vrcp.pop %v604
      %v637 = vrcp.pop %v605
      %v638 = vrcp.pop %v606
      %v639 = vrcp.pop %v607
      %v640 = vrcp.pop %v608
      %v641 = vrcp.pop %v609
      %v642 = vrcp.pop %v610
      %v643 = vrcp.pop %v611
      %v644 = vrcp.pop %v612
      %v645 = vmul.f32 %v406, %v613
      %v646 = vmul.f32 %v408, %v614
      %v647 = vmul.f32 %v411, %v615
      %v648 = vmul.f32 %v413, %v616
      %v649 = vmul.f32 %v416, %v617
      %v650 = vmul.f32 %v418, %v618
      %v651 = vmul.f32 %v421, %v619
      %v652 = vmul.f32 %v423, %v620
      %v653 = vmul.f32 %v426, %v621
      %v654 = vmul.f32 %v428, %v622
      %v655 = vmul.f32 %v431, %v623
      %v656 = vmul.f32 %v433, %v624
      %v657 = vmul.f32 %v436, %v625
      %v658 = vmul.f32 %v438, %v626
      %v659 = vmul.f32 %v441, %v627
      %v660 = vmul.f32 %v443, %v628
      %v661 = vmul.f32 %v446, %v629
      %v662 = vmul.f32 %v448, %v630
      %v663 = vmul.f32 %v451, %v631
      %v664 = vmul.f32 %v453, %v632
      %v665 = vmul.f32 %v456, %v633
      %v666 = vmul.f32 %v458, %v634
      %v667 = vmul.f32 %v461, %v635
      %v668 = vmul.f32 %v463, %v636
      %v669 = vmul.f32 %v466, %v637
      %v670 = vmul.f32 %v468, %v638
      %v671 = vmul.f32 %v471, %v639
      %v672 = vmul.f32 %v473, %v640
      %v673 = vmul.f32 %v476, %v641
      %v674 = vmul.f32 %v478, %v642
      %v675 = vmul.f32 %v481, %v643
      %v676 = vmul.f32 %v483, %v644
      %v677 = vpack.c.bf16 %v646, %v645
      %v678 = vpack.c.bf16 %v648, %v647
      %v679 = vpack.c.bf16 %v650, %v649
      %v680 = vpack.c.bf16 %v652, %v651
      %v681 = vpack.c.bf16 %v654, %v653
      %v682 = vpack.c.bf16 %v656, %v655
      %v683 = vpack.c.bf16 %v658, %v657
      %v684 = vpack.c.bf16 %v660, %v659
      %v685 = vpack.c.bf16 %v662, %v661
      %v686 = vpack.c.bf16 %v664, %v663
      %v687 = vpack.c.bf16 %v666, %v665
      %v688 = vpack.c.bf16 %v668, %v667
      %v689 = vpack.c.bf16 %v670, %v669
      %v690 = vpack.c.bf16 %v672, %v671
      %v691 = vpack.c.bf16 %v674, %v673
      %v692 = vpack.c.bf16 %v676, %v675
      %v693 = vld [vmem:[%s3] sm:$0x3]
      %vm694 = vcmask 31744
      %v696 = vsel %vm694, %v677, 0
      %v699 = vsel %vm694, %v678, 0
      %v702 = vsel %vm694, %v679, 0
      %v705 = vsel %vm694, %v680, 0
      %v708 = vsel %vm694, %v681, 0
      %v711 = vsel %vm694, %v682, 0
      %v714 = vsel %vm694, %v683, 0
      %v717 = vsel %vm694, %v684, 0
      %v720 = vsel %vm694, %v685, 0
      %v723 = vsel %vm694, %v686, 0
      %v726 = vsel %vm694, %v687, 0
      %v729 = vsel %vm694, %v688, 0
      %v732 = vsel %vm694, %v689, 0
      %v735 = vsel %vm694, %v690, 0
      %v738 = vsel %vm694, %v691, 0
      %v741 = vsel %vm694, %v692, 0
      %vm743 = vcmask 1041408
      %v745 = vsel %vm743, %v693, 0
      %747 = vmatpush.bf16.msra.mxu0 0
      %748 = vmatpush.bf16.msra.mxu0 0
      %749 = vmatpush.bf16.msra.mxu0 0
      %750 = vmatpush.bf16.msra.mxu0 0
      %751 = vmatpush.bf16.msra.mxu0 0
      %752 = vmatpush.bf16.msra.mxu0 0
      %753 = vmatpush.bf16.msra.mxu0 0
      %754 = vmatpush.bf16.msra.mxu0 %v745
      %755 = vmatmul.bf16.gmra.mxu0 %v696
      %v756 = vpop.f32.mrf.mxu0
      %v757 = vadd.f32 0.0, %v756
      %v758 = vpop.f32.mrf.mxu0
      %v759 = vadd.f32 0.0, %v758
      %760 = vmatmul.bf16.gmra.mxu0 %v699
      %v761 = vpop.f32.mrf.mxu0
      %v762 = vadd.f32 0.0, %v761
      %v763 = vpop.f32.mrf.mxu0
      %v764 = vadd.f32 0.0, %v763
      %765 = vmatmul.bf16.gmra.mxu0 %v702
      %v766 = vpop.f32.mrf.mxu0
      %v767 = vadd.f32 0.0, %v766
      %v768 = vpop.f32.mrf.mxu0
      %v769 = vadd.f32 0.0, %v768
      %770 = vmatmul.bf16.gmra.mxu0 %v705
      %v771 = vpop.f32.mrf.mxu0
      %v772 = vadd.f32 0.0, %v771
      %v773 = vpop.f32.mrf.mxu0
      %v774 = vadd.f32 0.0, %v773
      %775 = vmatmul.bf16.gmra.mxu0 %v708
      %v776 = vpop.f32.mrf.mxu0
      %v777 = vadd.f32 0.0, %v776
      %v778 = vpop.f32.mrf.mxu0
      %v779 = vadd.f32 0.0, %v778
      %780 = vmatmul.bf16.gmra.mxu0 %v711
      %v781 = vpop.f32.mrf.mxu0
      %v782 = vadd.f32 0.0, %v781
      %v783 = vpop.f32.mrf.mxu0
      %v784 = vadd.f32 0.0, %v783
      %785 = vmatmul.bf16.gmra.mxu0 %v714
      %v786 = vpop.f32.mrf.mxu0
      %v787 = vadd.f32 0.0, %v786
      %v788 = vpop.f32.mrf.mxu0
      %v789 = vadd.f32 0.0, %v788
      %790 = vmatmul.bf16.gmra.mxu0 %v717
      %v791 = vpop.f32.mrf.mxu0
      %v792 = vadd.f32 0.0, %v791
      %v793 = vpop.f32.mrf.mxu0
      %v794 = vadd.f32 0.0, %v793
      %795 = vmatmul.bf16.gmra.mxu0 %v720
      %v796 = vpop.f32.mrf.mxu0
      %v797 = vadd.f32 0.0, %v796
      %v798 = vpop.f32.mrf.mxu0
      %v799 = vadd.f32 0.0, %v798
      %800 = vmatmul.bf16.gmra.mxu0 %v723
      %v801 = vpop.f32.mrf.mxu0
      %v802 = vadd.f32 0.0, %v801
      %v803 = vpop.f32.mrf.mxu0
      %v804 = vadd.f32 0.0, %v803
      %805 = vmatmul.bf16.gmra.mxu0 %v726
      %v806 = vpop.f32.mrf.mxu0
      %v807 = vadd.f32 0.0, %v806
      %v808 = vpop.f32.mrf.mxu0
      %v809 = vadd.f32 0.0, %v808
      %810 = vmatmul.bf16.gmra.mxu0 %v729
      %v811 = vpop.f32.mrf.mxu0
      %v812 = vadd.f32 0.0, %v811
      %v813 = vpop.f32.mrf.mxu0
      %v814 = vadd.f32 0.0, %v813
      %815 = vmatmul.bf16.gmra.mxu0 %v732
      %v816 = vpop.f32.mrf.mxu0
      %v817 = vadd.f32 0.0, %v816
      %v818 = vpop.f32.mrf.mxu0
      %v819 = vadd.f32 0.0, %v818
      %820 = vmatmul.bf16.gmra.mxu0 %v735
      %v821 = vpop.f32.mrf.mxu0
      %v822 = vadd.f32 0.0, %v821
      %v823 = vpop.f32.mrf.mxu0
      %v824 = vadd.f32 0.0, %v823
      %825 = vmatmul.bf16.gmra.mxu0 %v738
      %v826 = vpop.f32.mrf.mxu0
      %v827 = vadd.f32 0.0, %v826
      %v828 = vpop.f32.mrf.mxu0
      %v829 = vadd.f32 0.0, %v828
      %830 = vmatmul.bf16.gmra.mxu0 %v741
      %v831 = vpop.f32.mrf.mxu0
      %v832 = vadd.f32 0.0, %v831
      %v833 = vpop.f32.mrf.mxu0
      %v834 = vadd.f32 0.0, %v833
      %835 = vdwg.mxu0
      %836 = vst.msk [vmem:[#allocation2] sm:$0xff] %vm694, -inf
      %837 = vst.msk [vmem:[#allocation2 + $0x8] sm:$0xff] %vm694, -inf
      %838 = vst.msk [vmem:[#allocation2 + $0x10] sm:$0xff] %vm694, -inf
      %839 = vst.msk [vmem:[#allocation2 + $0x18] sm:$0xff] %vm694, -inf
      %840 = vst.msk [vmem:[#allocation2 + $0x20] sm:$0xff] %vm694, -inf
      %841 = vst.msk [vmem:[#allocation2 + $0x28] sm:$0xff] %vm694, -inf
      %842 = vst.msk [vmem:[#allocation2 + $0x30] sm:$0xff] %vm694, -inf
      %843 = vst.msk [vmem:[#allocation2 + $0x38] sm:$0xff] %vm694, -inf
      %s844 = scalar_lea.vmem [#allocation2], 576
      %845 = vst.msk [vmem:[%s844] sm:$0xff] %vm694, -inf
      %846 = vst.msk [vmem:[%s844 + $0x8] sm:$0xff] %vm694, -inf
      %847 = vst.msk [vmem:[%s844 + $0x10] sm:$0xff] %vm694, -inf
      %848 = vst.msk [vmem:[%s844 + $0x18] sm:$0xff] %vm694, -inf
      %849 = vst.msk [vmem:[%s844 + $0x20] sm:$0xff] %vm694, -inf
      %850 = vst.msk [vmem:[%s844 + $0x28] sm:$0xff] %vm694, -inf
      %851 = vst.msk [vmem:[%s844 + $0x30] sm:$0xff] %vm694, -inf
      %852 = vst.msk [vmem:[%s844 + $0x38] sm:$0xff] %vm694, -inf
      %853 = vst.msk [vmem:[#allocation2] sm:$0xff] %vm694, -inf
      %854 = vst.msk [vmem:[#allocation2 + $0x20] sm:$0xff] %vm694, -inf
      %855 = vst.msk [vmem:[#allocation2 + $0x40] sm:$0xff] %vm694, -inf
      %856 = vst.msk [vmem:[#allocation2 + $0x60] sm:$0xff] %vm694, -inf
      %857 = vst.msk [vmem:[#allocation2 + $0x80] sm:$0xff] %vm694, -inf
      %858 = vst.msk [vmem:[#allocation2 + $0xa0] sm:$0xff] %vm694, -inf
      %859 = vst.msk [vmem:[#allocation2 + $0xc0] sm:$0xff] %vm694, -inf
      %860 = vst.msk [vmem:[#allocation2 + $0xe0] sm:$0xff] %vm694, -inf
      %861 = vst.msk [vmem:[#allocation2 + $0x100] sm:$0xff] %vm694, -inf
      %862 = vst.msk [vmem:[#allocation2 + $0x120] sm:$0xff] %vm694, -inf
      %863 = vst.msk [vmem:[#allocation2 + $0x140] sm:$0xff] %vm694, -inf
      %864 = vst.msk [vmem:[#allocation2 + $0x160] sm:$0xff] %vm694, -inf
      %865 = vst.msk [vmem:[#allocation2 + $0x180] sm:$0xff] %vm694, -inf
      %866 = vst.msk [vmem:[#allocation2 + $0x1a0] sm:$0xff] %vm694, -inf
      %867 = vst.msk [vmem:[#allocation2 + $0x1c0] sm:$0xff] %vm694, -inf
      %868 = vst.msk [vmem:[#allocation2 + $0x1e0] sm:$0xff] %vm694, -inf
      %869 = vst.msk [vmem:[#allocation2 + $0x200] sm:$0xff] %vm694, -inf
      %870 = vst.msk [vmem:[#allocation2 + $0x220] sm:$0xff] %vm694, -inf
      %871 = vst.msk [vmem:[#allocation2 + $0x240] sm:$0xff] %vm694, -inf
      %872 = vst.msk [vmem:[#allocation2 + $0x260] sm:$0xff] %vm694, -inf
      %873 = vst.msk [vmem:[#allocation2 + $0x18] sm:$0xff] %vm694, -inf
      %874 = vst.msk [vmem:[#allocation2 + $0x38] sm:$0xff] %vm694, -inf
      %875 = vst.msk [vmem:[#allocation2 + $0x58] sm:$0xff] %vm694, -inf
      %876 = vst.msk [vmem:[#allocation2 + $0x78] sm:$0xff] %vm694, -inf
      %877 = vst.msk [vmem:[#allocation2 + $0x98] sm:$0xff] %vm694, -inf
      %878 = vst.msk [vmem:[#allocation2 + $0xb8] sm:$0xff] %vm694, -inf
      %879 = vst.msk [vmem:[#allocation2 + $0xd8] sm:$0xff] %vm694, -inf
      %880 = vst.msk [vmem:[#allocation2 + $0xf8] sm:$0xff] %vm694, -inf
      %881 = vst.msk [vmem:[#allocation2 + $0x118] sm:$0xff] %vm694, -inf
      %882 = vst.msk [vmem:[#allocation2 + $0x138] sm:$0xff] %vm694, -inf
      %883 = vst.msk [vmem:[#allocation2 + $0x158] sm:$0xff] %vm694, -inf
      %884 = vst.msk [vmem:[#allocation2 + $0x178] sm:$0xff] %vm694, -inf
      %885 = vst.msk [vmem:[#allocation2 + $0x198] sm:$0xff] %vm694, -inf
      %886 = vst.msk [vmem:[#allocation2 + $0x1b8] sm:$0xff] %vm694, -inf
      %887 = vst.msk [vmem:[#allocation2 + $0x1d8] sm:$0xff] %vm694, -inf
      %888 = vst.msk [vmem:[#allocation2 + $0x1f8] sm:$0xff] %vm694, -inf
      %889 = vst.msk [vmem:[#allocation2 + $0x218] sm:$0xff] %vm694, -inf
      %890 = vst.msk [vmem:[#allocation2 + $0x238] sm:$0xff] %vm694, -inf
      %891 = vst.msk [vmem:[#allocation2 + $0x258] sm:$0xff] %vm694, -inf
      %892 = vst.msk [vmem:[#allocation2 + $0x278] sm:$0xff] %vm694, -inf
      loop: start=0, step=1, limit=3
      $region41: #{tpu_custom_call.1} parent=39 // loop_pre_header
        _
      $region42: #{tpu_custom_call.1} parent=39 // loop_header
        %s894 = sphi 0, %s898
        %p895 = scmp.ge.s32.totalorder %s894, 3
        %v899 = vphi %v757, %v1946
        %v900 = vphi %v759, %v1947
        %v901 = vphi %v762, %v1948
        %v902 = vphi %v764, %v1949
        %v903 = vphi %v767, %v1950
        %v904 = vphi %v769, %v1951
        %v905 = vphi %v772, %v1952
        %v906 = vphi %v774, %v1953
        %v907 = vphi %v777, %v1954
        %v908 = vphi %v779, %v1955
        %v909 = vphi %v782, %v1956
        %v910 = vphi %v784, %v1957
        %v911 = vphi %v787, %v1958
        %v912 = vphi %v789, %v1959
        %v913 = vphi %v792, %v1960
        %v914 = vphi %v794, %v1961
        %v915 = vphi %v797, %v1962
        %v916 = vphi %v799, %v1963
        %v917 = vphi %v802, %v1964
        %v918 = vphi %v804, %v1965
        %v919 = vphi %v807, %v1966
        %v920 = vphi %v809, %v1967
        %v921 = vphi %v812, %v1968
        %v922 = vphi %v814, %v1969
        %v923 = vphi %v817, %v1970
        %v924 = vphi %v819, %v1971
        %v925 = vphi %v822, %v1972
        %v926 = vphi %v824, %v1973
        %v927 = vphi %v827, %v1974
        %v928 = vphi %v829, %v1975
        %v929 = vphi %v832, %v1976
        %v930 = vphi %v834, %v1977
        %v931 = vphi %v645, %v1754
        %v932 = vphi %v646, %v1755
        %v933 = vphi %v647, %v1756
        %v934 = vphi %v648, %v1757
        %v935 = vphi %v649, %v1758
        %v936 = vphi %v650, %v1759
        %v937 = vphi %v651, %v1760
        %v938 = vphi %v652, %v1761
        %v939 = vphi %v653, %v1762
        %v940 = vphi %v654, %v1763
        %v941 = vphi %v655, %v1764
        %v942 = vphi %v656, %v1765
        %v943 = vphi %v657, %v1766
        %v944 = vphi %v658, %v1767
        %v945 = vphi %v659, %v1768
        %v946 = vphi %v660, %v1769
        %v947 = vphi %v661, %v1770
        %v948 = vphi %v662, %v1771
        %v949 = vphi %v663, %v1772
        %v950 = vphi %v664, %v1773
        %v951 = vphi %v665, %v1774
        %v952 = vphi %v666, %v1775
        %v953 = vphi %v667, %v1776
        %v954 = vphi %v668, %v1777
        %v955 = vphi %v669, %v1778
        %v956 = vphi %v670, %v1779
        %v957 = vphi %v671, %v1780
        %v958 = vphi %v672, %v1781
        %v959 = vphi %v673, %v1782
        %v960 = vphi %v674, %v1783
        %v961 = vphi %v675, %v1784
        %v962 = vphi %v676, %v1785
      $region43: #{tpu_custom_call.1} parent=39 // loop_header_branch
        %897 = sbr.rel (%p895) target = $region47
      $region44: #{tpu_custom_call.1} parent=39 // loop_body
        %s963 = scalar_lea.vmem [#allocation2], 64
        %964 = vst.msk [vmem:[%s963 + $0x8] sm:$0xff] %vm694, %v931
        %965 = vst.msk [vmem:[%s963 + $0x10] sm:$0xff] %vm694, %v932
        %966 = vst.msk [vmem:[%s963 + $0x28] sm:$0xff] %vm694, %v933
        %967 = vst.msk [vmem:[%s963 + $0x30] sm:$0xff] %vm694, %v934
        %968 = vst.msk [vmem:[%s963 + $0x48] sm:$0xff] %vm694, %v935
        %969 = vst.msk [vmem:[%s963 + $0x50] sm:$0xff] %vm694, %v936
        %970 = vst.msk [vmem:[%s963 + $0x68] sm:$0xff] %vm694, %v937
        %971 = vst.msk [vmem:[%s963 + $0x70] sm:$0xff] %vm694, %v938
        %972 = vst.msk [vmem:[%s963 + $0x88] sm:$0xff] %vm694, %v939
        %973 = vst.msk [vmem:[%s963 + $0x90] sm:$0xff] %vm694, %v940
        %974 = vst.msk [vmem:[%s963 + $0xa8] sm:$0xff] %vm694, %v941
        %975 = vst.msk [vmem:[%s963 + $0xb0] sm:$0xff] %vm694, %v942
        %976 = vst.msk [vmem:[%s963 + $0xc8] sm:$0xff] %vm694, %v943
        %977 = vst.msk [vmem:[%s963 + $0xd0] sm:$0xff] %vm694, %v944
        %978 = vst.msk [vmem:[%s963 + $0xe8] sm:$0xff] %vm694, %v945
        %979 = vst.msk [vmem:[%s963 + $0xf0] sm:$0xff] %vm694, %v946
        %980 = vst.msk [vmem:[%s963 + $0x108] sm:$0xff] %vm694, %v947
        %981 = vst.msk [vmem:[%s963 + $0x110] sm:$0xff] %vm694, %v948
        %982 = vst.msk [vmem:[%s963 + $0x128] sm:$0xff] %vm694, %v949
        %983 = vst.msk [vmem:[%s963 + $0x130] sm:$0xff] %vm694, %v950
        %984 = vst.msk [vmem:[%s963 + $0x148] sm:$0xff] %vm694, %v951
        %985 = vst.msk [vmem:[%s963 + $0x150] sm:$0xff] %vm694, %v952
        %986 = vst.msk [vmem:[%s963 + $0x168] sm:$0xff] %vm694, %v953
        %987 = vst.msk [vmem:[%s963 + $0x170] sm:$0xff] %vm694, %v954
        %988 = vst.msk [vmem:[%s963 + $0x188] sm:$0xff] %vm694, %v955
        %989 = vst.msk [vmem:[%s963 + $0x190] sm:$0xff] %vm694, %v956
        %990 = vst.msk [vmem:[%s963 + $0x1a8] sm:$0xff] %vm694, %v957
        %991 = vst.msk [vmem:[%s963 + $0x1b0] sm:$0xff] %vm694, %v958
        %992 = vst.msk [vmem:[%s963 + $0x1c8] sm:$0xff] %vm694, %v959
        %993 = vst.msk [vmem:[%s963 + $0x1d0] sm:$0xff] %vm694, %v960
        %994 = vst.msk [vmem:[%s963 + $0x1e8] sm:$0xff] %vm694, %v961
        %995 = vst.msk [vmem:[%s963 + $0x1f0] sm:$0xff] %vm694, %v962
        %v996 = vld [vmem:[#allocation2] sm:$0xff]
        %v997 = vld [vmem:[#allocation2 + $0x8] sm:$0xff]
        %v998 = vld [vmem:[#allocation2 + $0x10] sm:$0xff]
        %v999 = vld [vmem:[#allocation2 + $0x18] sm:$0xff]
        %v1000 = vld [vmem:[#allocation2 + $0x20] sm:$0xff]
        %v1001 = vld [vmem:[#allocation2 + $0x28] sm:$0xff]
        %v1002 = vld [vmem:[#allocation2 + $0x30] sm:$0xff]
        %v1003 = vld [vmem:[#allocation2 + $0x38] sm:$0xff]
        %v1004 = vld [vmem:[#allocation2 + $0x40] sm:$0xff]
        %v1005 = vld [vmem:[#allocation2 + $0x48] sm:$0xff]
        %v1006 = vld [vmem:[#allocation2 + $0x50] sm:$0xff]
        %v1007 = vld [vmem:[#allocation2 + $0x58] sm:$0xff]
        %v1008 = vld [vmem:[#allocation2 + $0x60] sm:$0xff]
        %v1009 = vld [vmem:[#allocation2 + $0x68] sm:$0xff]
        %v1010 = vld [vmem:[#allocation2 + $0x70] sm:$0xff]
        %v1011 = vld [vmem:[#allocation2 + $0x78] sm:$0xff]
        %v1012 = vld [vmem:[#allocation2 + $0x80] sm:$0xff]
        %v1013 = vld [vmem:[#allocation2 + $0x88] sm:$0xff]
        %v1014 = vld [vmem:[#allocation2 + $0x90] sm:$0xff]
        %v1015 = vld [vmem:[#allocation2 + $0x98] sm:$0xff]
        %v1016 = vld [vmem:[#allocation2 + $0xa0] sm:$0xff]
        %v1017 = vld [vmem:[#allocation2 + $0xa8] sm:$0xff]
        %v1018 = vld [vmem:[#allocation2 + $0xb0] sm:$0xff]
        %v1019 = vld [vmem:[#allocation2 + $0xb8] sm:$0xff]
        %v1020 = vld [vmem:[#allocation2 + $0xc0] sm:$0xff]
        %v1021 = vld [vmem:[#allocation2 + $0xc8] sm:$0xff]
        %v1022 = vld [vmem:[#allocation2 + $0xd0] sm:$0xff]
        %v1023 = vld [vmem:[#allocation2 + $0xd8] sm:$0xff]
        %v1024 = vld [vmem:[#allocation2 + $0xe0] sm:$0xff]
        %v1025 = vld [vmem:[#allocation2 + $0xe8] sm:$0xff]
        %v1026 = vld [vmem:[#allocation2 + $0xf0] sm:$0xff]
        %v1027 = vld [vmem:[#allocation2 + $0xf8] sm:$0xff]
        %v1028 = vld [vmem:[#allocation2 + $0x100] sm:$0xff]
        %v1029 = vld [vmem:[#allocation2 + $0x108] sm:$0xff]
        %v1030 = vld [vmem:[#allocation2 + $0x110] sm:$0xff]
        %v1031 = vld [vmem:[#allocation2 + $0x118] sm:$0xff]
        %v1032 = vld [vmem:[#allocation2 + $0x120] sm:$0xff]
        %v1033 = vld [vmem:[#allocation2 + $0x128] sm:$0xff]
        %v1034 = vld [vmem:[#allocation2 + $0x130] sm:$0xff]
        %v1035 = vld [vmem:[#allocation2 + $0x138] sm:$0xff]
        %v1036 = vld [vmem:[#allocation2 + $0x140] sm:$0xff]
        %v1037 = vld [vmem:[#allocation2 + $0x148] sm:$0xff]
        %v1038 = vld [vmem:[#allocation2 + $0x150] sm:$0xff]
        %v1039 = vld [vmem:[#allocation2 + $0x158] sm:$0xff]
        %v1040 = vld [vmem:[#allocation2 + $0x160] sm:$0xff]
        %v1041 = vld [vmem:[#allocation2 + $0x168] sm:$0xff]
        %v1042 = vld [vmem:[#allocation2 + $0x170] sm:$0xff]
        %v1043 = vld [vmem:[#allocation2 + $0x178] sm:$0xff]
        %v1044 = vld [vmem:[#allocation2 + $0x180] sm:$0xff]
        %v1045 = vld [vmem:[#allocation2 + $0x188] sm:$0xff]
        %v1046 = vld [vmem:[#allocation2 + $0x190] sm:$0xff]
        %v1047 = vld [vmem:[#allocation2 + $0x198] sm:$0xff]
        %v1048 = vld [vmem:[#allocation2 + $0x1a0] sm:$0xff]
        %v1049 = vld [vmem:[#allocation2 + $0x1a8] sm:$0xff]
        %v1050 = vld [vmem:[#allocation2 + $0x1b0] sm:$0xff]
        %v1051 = vld [vmem:[#allocation2 + $0x1b8] sm:$0xff]
        %v1052 = vld [vmem:[#allocation2 + $0x1c0] sm:$0xff]
        %v1053 = vld [vmem:[#allocation2 + $0x1c8] sm:$0xff]
        %v1054 = vld [vmem:[#allocation2 + $0x1d0] sm:$0xff]
        %v1055 = vld [vmem:[#allocation2 + $0x1d8] sm:$0xff]
        %v1056 = vld [vmem:[#allocation2 + $0x1e0] sm:$0xff]
        %v1057 = vld [vmem:[#allocation2 + $0x1e8] sm:$0xff]
        %v1058 = vld [vmem:[#allocation2 + $0x1f0] sm:$0xff]
        %v1059 = vld [vmem:[#allocation2 + $0x1f8] sm:$0xff]
        %v1060 = vld [vmem:[#allocation2 + $0x200] sm:$0xff]
        %v1061 = vld [vmem:[#allocation2 + $0x208] sm:$0xff]
        %v1062 = vld [vmem:[#allocation2 + $0x210] sm:$0xff]
        %v1063 = vld [vmem:[#allocation2 + $0x218] sm:$0xff]
        %v1064 = vld [vmem:[#allocation2 + $0x220] sm:$0xff]
        %v1065 = vld [vmem:[#allocation2 + $0x228] sm:$0xff]
        %v1066 = vld [vmem:[#allocation2 + $0x230] sm:$0xff]
        %v1067 = vld [vmem:[#allocation2 + $0x238] sm:$0xff]
        %v1068 = vld [vmem:[#allocation2 + $0x240] sm:$0xff]
        %v1069 = vld [vmem:[#allocation2 + $0x248] sm:$0xff]
        %v1070 = vld [vmem:[#allocation2 + $0x250] sm:$0xff]
        %v1071 = vld [vmem:[#allocation2 + $0x258] sm:$0xff]
        %v1072 = vld [vmem:[#allocation2 + $0x260] sm:$0xff]
        %v1073 = vld [vmem:[#allocation2 + $0x268] sm:$0xff]
        %v1074 = vld [vmem:[#allocation2 + $0x270] sm:$0xff]
        %v1075 = vld [vmem:[#allocation2 + $0x278] sm:$0xff]
        %v1076 = vmax.f32 %v996, %v1000
        %v1077 = vmax.f32 %v997, %v1001
        %v1078 = vmax.f32 %v998, %v1002
        %v1079 = vmax.f32 %v999, %v1003
        %v1080 = vmax.f32 %v1000, %v1004
        %v1081 = vmax.f32 %v1001, %v1005
        %v1082 = vmax.f32 %v1002, %v1006
        %v1083 = vmax.f32 %v1003, %v1007
        %v1084 = vmax.f32 %v1004, %v1008
        %v1085 = vmax.f32 %v1005, %v1009
        %v1086 = vmax.f32 %v1006, %v1010
        %v1087 = vmax.f32 %v1007, %v1011
        %v1088 = vmax.f32 %v1008, %v1012
        %v1089 = vmax.f32 %v1009, %v1013
        %v1090 = vmax.f32 %v1010, %v1014
        %v1091 = vmax.f32 %v1011, %v1015
        %v1092 = vmax.f32 %v1012, %v1016
        %v1093 = vmax.f32 %v1013, %v1017
        %v1094 = vmax.f32 %v1014, %v1018
        %v1095 = vmax.f32 %v1015, %v1019
        %v1096 = vmax.f32 %v1016, %v1020
        %v1097 = vmax.f32 %v1017, %v1021
        %v1098 = vmax.f32 %v1018, %v1022
        %v1099 = vmax.f32 %v1019, %v1023
        %v1100 = vmax.f32 %v1020, %v1024
        %v1101 = vmax.f32 %v1021, %v1025
        %v1102 = vmax.f32 %v1022, %v1026
        %v1103 = vmax.f32 %v1023, %v1027
        %v1104 = vmax.f32 %v1024, %v1028
        %v1105 = vmax.f32 %v1025, %v1029
        %v1106 = vmax.f32 %v1026, %v1030
        %v1107 = vmax.f32 %v1027, %v1031
        %v1108 = vmax.f32 %v1028, %v1032
        %v1109 = vmax.f32 %v1029, %v1033
        %v1110 = vmax.f32 %v1030, %v1034
        %v1111 = vmax.f32 %v1031, %v1035
        %v1112 = vmax.f32 %v1032, %v1036
        %v1113 = vmax.f32 %v1033, %v1037
        %v1114 = vmax.f32 %v1034, %v1038
        %v1115 = vmax.f32 %v1035, %v1039
        %v1116 = vmax.f32 %v1036, %v1040
        %v1117 = vmax.f32 %v1037, %v1041
        %v1118 = vmax.f32 %v1038, %v1042
        %v1119 = vmax.f32 %v1039, %v1043
        %v1120 = vmax.f32 %v1040, %v1044
        %v1121 = vmax.f32 %v1041, %v1045
        %v1122 = vmax.f32 %v1042, %v1046
        %v1123 = vmax.f32 %v1043, %v1047
        %v1124 = vmax.f32 %v1044, %v1048
        %v1125 = vmax.f32 %v1045, %v1049
        %v1126 = vmax.f32 %v1046, %v1050
        %v1127 = vmax.f32 %v1047, %v1051
        %v1128 = vmax.f32 %v1048, %v1052
        %v1129 = vmax.f32 %v1049, %v1053
        %v1130 = vmax.f32 %v1050, %v1054
        %v1131 = vmax.f32 %v1051, %v1055
        %v1132 = vmax.f32 %v1052, %v1056
        %v1133 = vmax.f32 %v1053, %v1057
        %v1134 = vmax.f32 %v1054, %v1058
        %v1135 = vmax.f32 %v1055, %v1059
        %v1136 = vmax.f32 %v1056, %v1060
        %v1137 = vmax.f32 %v1057, %v1061
        %v1138 = vmax.f32 %v1058, %v1062
        %v1139 = vmax.f32 %v1059, %v1063
        %v1140 = vmax.f32 %v1076, %v1004
        %v1141 = vmax.f32 %v1077, %v1005
        %v1142 = vmax.f32 %v1078, %v1006
        %v1143 = vmax.f32 %v1079, %v1007
        %v1144 = vmax.f32 %v1080, %v1008
        %v1145 = vmax.f32 %v1081, %v1009
        %v1146 = vmax.f32 %v1082, %v1010
        %v1147 = vmax.f32 %v1083, %v1011
        %v1148 = vmax.f32 %v1084, %v1012
        %v1149 = vmax.f32 %v1085, %v1013
        %v1150 = vmax.f32 %v1086, %v1014
        %v1151 = vmax.f32 %v1087, %v1015
        %v1152 = vmax.f32 %v1088, %v1016
        %v1153 = vmax.f32 %v1089, %v1017
        %v1154 = vmax.f32 %v1090, %v1018
        %v1155 = vmax.f32 %v1091, %v1019
        %v1156 = vmax.f32 %v1092, %v1020
        %v1157 = vmax.f32 %v1093, %v1021
        %v1158 = vmax.f32 %v1094, %v1022
        %v1159 = vmax.f32 %v1095, %v1023
        %v1160 = vmax.f32 %v1096, %v1024
        %v1161 = vmax.f32 %v1097, %v1025
        %v1162 = vmax.f32 %v1098, %v1026
        %v1163 = vmax.f32 %v1099, %v1027
        %v1164 = vmax.f32 %v1100, %v1028
        %v1165 = vmax.f32 %v1101, %v1029
        %v1166 = vmax.f32 %v1102, %v1030
        %v1167 = vmax.f32 %v1103, %v1031
        %v1168 = vmax.f32 %v1104, %v1032
        %v1169 = vmax.f32 %v1105, %v1033
        %v1170 = vmax.f32 %v1106, %v1034
        %v1171 = vmax.f32 %v1107, %v1035
        %v1172 = vmax.f32 %v1108, %v1036
        %v1173 = vmax.f32 %v1109, %v1037
        %v1174 = vmax.f32 %v1110, %v1038
        %v1175 = vmax.f32 %v1111, %v1039
        %v1176 = vmax.f32 %v1112, %v1040
        %v1177 = vmax.f32 %v1113, %v1041
        %v1178 = vmax.f32 %v1114, %v1042
        %v1179 = vmax.f32 %v1115, %v1043
        %v1180 = vmax.f32 %v1116, %v1044
        %v1181 = vmax.f32 %v1117, %v1045
        %v1182 = vmax.f32 %v1118, %v1046
        %v1183 = vmax.f32 %v1119, %v1047
        %v1184 = vmax.f32 %v1120, %v1048
        %v1185 = vmax.f32 %v1121, %v1049
        %v1186 = vmax.f32 %v1122, %v1050
        %v1187 = vmax.f32 %v1123, %v1051
        %v1188 = vmax.f32 %v1124, %v1052
        %v1189 = vmax.f32 %v1125, %v1053
        %v1190 = vmax.f32 %v1126, %v1054
        %v1191 = vmax.f32 %v1127, %v1055
        %v1192 = vmax.f32 %v1128, %v1056
        %v1193 = vmax.f32 %v1129, %v1057
        %v1194 = vmax.f32 %v1130, %v1058
        %v1195 = vmax.f32 %v1131, %v1059
        %v1196 = vmax.f32 %v1132, %v1060
        %v1197 = vmax.f32 %v1133, %v1061
        %v1198 = vmax.f32 %v1134, %v1062
        %v1199 = vmax.f32 %v1135, %v1063
        %v1200 = vmax.f32 %v1136, %v1064
        %v1201 = vmax.f32 %v1137, %v1065
        %v1202 = vmax.f32 %v1138, %v1066
        %v1203 = vmax.f32 %v1139, %v1067
        %v1204 = vmax.f32 %v1140, %v1008
        %v1205 = vmax.f32 %v1141, %v1009
        %v1206 = vmax.f32 %v1142, %v1010
        %v1207 = vmax.f32 %v1143, %v1011
        %v1208 = vmax.f32 %v1144, %v1012
        %v1209 = vmax.f32 %v1145, %v1013
        %v1210 = vmax.f32 %v1146, %v1014
        %v1211 = vmax.f32 %v1147, %v1015
        %v1212 = vmax.f32 %v1148, %v1016
        %v1213 = vmax.f32 %v1149, %v1017
        %v1214 = vmax.f32 %v1150, %v1018
        %v1215 = vmax.f32 %v1151, %v1019
        %v1216 = vmax.f32 %v1152, %v1020
        %v1217 = vmax.f32 %v1153, %v1021
        %v1218 = vmax.f32 %v1154, %v1022
        %v1219 = vmax.f32 %v1155, %v1023
        %v1220 = vmax.f32 %v1156, %v1024
        %v1221 = vmax.f32 %v1157, %v1025
        %v1222 = vmax.f32 %v1158, %v1026
        %v1223 = vmax.f32 %v1159, %v1027
        %v1224 = vmax.f32 %v1160, %v1028
        %v1225 = vmax.f32 %v1161, %v1029
        %v1226 = vmax.f32 %v1162, %v1030
        %v1227 = vmax.f32 %v1163, %v1031
        %v1228 = vmax.f32 %v1164, %v1032
        %v1229 = vmax.f32 %v1165, %v1033
        %v1230 = vmax.f32 %v1166, %v1034
        %v1231 = vmax.f32 %v1167, %v1035
        %v1232 = vmax.f32 %v1168, %v1036
        %v1233 = vmax.f32 %v1169, %v1037
        %v1234 = vmax.f32 %v1170, %v1038
        %v1235 = vmax.f32 %v1171, %v1039
        %v1236 = vmax.f32 %v1172, %v1040
        %v1237 = vmax.f32 %v1173, %v1041
        %v1238 = vmax.f32 %v1174, %v1042
        %v1239 = vmax.f32 %v1175, %v1043
        %v1240 = vmax.f32 %v1176, %v1044
        %v1241 = vmax.f32 %v1177, %v1045
        %v1242 = vmax.f32 %v1178, %v1046
        %v1243 = vmax.f32 %v1179, %v1047
        %v1244 = vmax.f32 %v1180, %v1048
        %v1245 = vmax.f32 %v1181, %v1049
        %v1246 = vmax.f32 %v1182, %v1050
        %v1247 = vmax.f32 %v1183, %v1051
        %v1248 = vmax.f32 %v1184, %v1052
        %v1249 = vmax.f32 %v1185, %v1053
        %v1250 = vmax.f32 %v1186, %v1054
        %v1251 = vmax.f32 %v1187, %v1055
        %v1252 = vmax.f32 %v1188, %v1056
        %v1253 = vmax.f32 %v1189, %v1057
        %v1254 = vmax.f32 %v1190, %v1058
        %v1255 = vmax.f32 %v1191, %v1059
        %v1256 = vmax.f32 %v1192, %v1060
        %v1257 = vmax.f32 %v1193, %v1061
        %v1258 = vmax.f32 %v1194, %v1062
        %v1259 = vmax.f32 %v1195, %v1063
        %v1260 = vmax.f32 %v1196, %v1064
        %v1261 = vmax.f32 %v1197, %v1065
        %v1262 = vmax.f32 %v1198, %v1066
        %v1263 = vmax.f32 %v1199, %v1067
        %v1264 = vmax.f32 %v1200, %v1068
        %v1265 = vmax.f32 %v1201, %v1069
        %v1266 = vmax.f32 %v1202, %v1070
        %v1267 = vmax.f32 %v1203, %v1071
        %v1268 = vmax.f32 %v1204, %v1012
        %v1269 = vmax.f32 %v1205, %v1013
        %v1270 = vmax.f32 %v1206, %v1014
        %v1271 = vmax.f32 %v1207, %v1015
        %v1272 = vmax.f32 %v1208, %v1016
        %v1273 = vmax.f32 %v1209, %v1017
        %v1274 = vmax.f32 %v1210, %v1018
        %v1275 = vmax.f32 %v1211, %v1019
        %v1276 = vmax.f32 %v1212, %v1020
        %v1277 = vmax.f32 %v1213, %v1021
        %v1278 = vmax.f32 %v1214, %v1022
        %v1279 = vmax.f32 %v1215, %v1023
        %v1280 = vmax.f32 %v1216, %v1024
        %v1281 = vmax.f32 %v1217, %v1025
        %v1282 = vmax.f32 %v1218, %v1026
        %v1283 = vmax.f32 %v1219, %v1027
        %v1284 = vmax.f32 %v1220, %v1028
        %v1285 = vmax.f32 %v1221, %v1029
        %v1286 = vmax.f32 %v1222, %v1030
        %v1287 = vmax.f32 %v1223, %v1031
        %v1288 = vmax.f32 %v1224, %v1032
        %v1289 = vmax.f32 %v1225, %v1033
        %v1290 = vmax.f32 %v1226, %v1034
        %v1291 = vmax.f32 %v1227, %v1035
        %v1292 = vmax.f32 %v1228, %v1036
        %v1293 = vmax.f32 %v1229, %v1037
        %v1294 = vmax.f32 %v1230, %v1038
        %v1295 = vmax.f32 %v1231, %v1039
        %v1296 = vmax.f32 %v1232, %v1040
        %v1297 = vmax.f32 %v1233, %v1041
        %v1298 = vmax.f32 %v1234, %v1042
        %v1299 = vmax.f32 %v1235, %v1043
        %v1300 = vmax.f32 %v1236, %v1044
        %v1301 = vmax.f32 %v1237, %v1045
        %v1302 = vmax.f32 %v1238, %v1046
        %v1303 = vmax.f32 %v1239, %v1047
        %v1304 = vmax.f32 %v1240, %v1048
        %v1305 = vmax.f32 %v1241, %v1049
        %v1306 = vmax.f32 %v1242, %v1050
        %v1307 = vmax.f32 %v1243, %v1051
        %v1308 = vmax.f32 %v1244, %v1052
        %v1309 = vmax.f32 %v1245, %v1053
        %v1310 = vmax.f32 %v1246, %v1054
        %v1311 = vmax.f32 %v1247, %v1055
        %v1312 = vmax.f32 %v1248, %v1056
        %v1313 = vmax.f32 %v1249, %v1057
        %v1314 = vmax.f32 %v1250, %v1058
        %v1315 = vmax.f32 %v1251, %v1059
        %v1316 = vmax.f32 %v1252, %v1060
        %v1317 = vmax.f32 %v1253, %v1061
        %v1318 = vmax.f32 %v1254, %v1062
        %v1319 = vmax.f32 %v1255, %v1063
        %v1320 = vmax.f32 %v1256, %v1064
        %v1321 = vmax.f32 %v1257, %v1065
        %v1322 = vmax.f32 %v1258, %v1066
        %v1323 = vmax.f32 %v1259, %v1067
        %v1324 = vmax.f32 %v1260, %v1068
        %v1325 = vmax.f32 %v1261, %v1069
        %v1326 = vmax.f32 %v1262, %v1070
        %v1327 = vmax.f32 %v1263, %v1071
        %v1328 = vmax.f32 %v1264, %v1072
        %v1329 = vmax.f32 %v1265, %v1073
        %v1330 = vmax.f32 %v1266, %v1074
        %v1331 = vmax.f32 %v1267, %v1075
        %v1332 = vrot.slane %v1268, 6
        %v1333 = vrot.slane %v1269, 6
        %v1334 = vrot.slane %v1270, 6
        %v1335 = vrot.slane %v1272, 6
        %v1336 = vrot.slane %v1273, 6
        %v1337 = vrot.slane %v1274, 6
        %v1338 = vrot.slane %v1276, 6
        %v1339 = vrot.slane %v1277, 6
        %v1340 = vrot.slane %v1278, 6
        %v1341 = vrot.slane %v1280, 6
        %v1342 = vrot.slane %v1281, 6
        %v1343 = vrot.slane %v1282, 6
        %v1344 = vrot.slane %v1284, 6
        %v1345 = vrot.slane %v1285, 6
        %v1346 = vrot.slane %v1286, 6
        %v1347 = vrot.slane %v1288, 6
        %v1348 = vrot.slane %v1289, 6
        %v1349 = vrot.slane %v1290, 6
        %v1350 = vrot.slane %v1292, 6
        %v1351 = vrot.slane %v1293, 6
        %v1352 = vrot.slane %v1294, 6
        %v1353 = vrot.slane %v1296, 6
        %v1354 = vrot.slane %v1297, 6
        %v1355 = vrot.slane %v1298, 6
        %v1356 = vrot.slane %v1300, 6
        %v1357 = vrot.slane %v1301, 6
        %v1358 = vrot.slane %v1302, 6
        %v1359 = vrot.slane %v1304, 6
        %v1360 = vrot.slane %v1305, 6
        %v1361 = vrot.slane %v1306, 6
        %v1362 = vrot.slane %v1308, 6
        %v1363 = vrot.slane %v1309, 6
        %v1364 = vrot.slane %v1310, 6
        %v1365 = vrot.slane %v1312, 6
        %v1366 = vrot.slane %v1313, 6
        %v1367 = vrot.slane %v1314, 6
        %v1368 = vrot.slane %v1316, 6
        %v1369 = vrot.slane %v1317, 6
        %v1370 = vrot.slane %v1318, 6
        %v1371 = vrot.slane %v1320, 6
        %v1372 = vrot.slane %v1321, 6
        %v1373 = vrot.slane %v1322, 6
        %v1374 = vrot.slane %v1324, 6
        %v1375 = vrot.slane %v1325, 6
        %v1376 = vrot.slane %v1326, 6
        %v1377 = vrot.slane %v1328, 6
        %v1378 = vrot.slane %v1329, 6
        %v1379 = vrot.slane %v1330, 6
        %v1380 = vlaneseq
        %v1381 = vshrl.u32 %v1380, 7
        %vm1382 = vcmp.lt.s32.totalorder %v1381, 2
        %v1383 = vsel %vm1382, %v1378, %v1379
        %v1384 = vsel %vm1382, %v1377, %v1378
        %v1385 = vsel %vm1382, %v1375, %v1376
        %v1386 = vsel %vm1382, %v1374, %v1375
        %v1387 = vsel %vm1382, %v1372, %v1373
        %v1388 = vsel %vm1382, %v1371, %v1372
        %v1389 = vsel %vm1382, %v1369, %v1370
        %v1390 = vsel %vm1382, %v1368, %v1369
        %v1391 = vsel %vm1382, %v1366, %v1367
        %v1392 = vsel %vm1382, %v1365, %v1366
        %v1393 = vsel %vm1382, %v1363, %v1364
        %v1394 = vsel %vm1382, %v1362, %v1363
        %v1395 = vsel %vm1382, %v1360, %v1361
        %v1396 = vsel %vm1382, %v1359, %v1360
        %v1397 = vsel %vm1382, %v1357, %v1358
        %v1398 = vsel %vm1382, %v1356, %v1357
        %v1399 = vsel %vm1382, %v1354, %v1355
        %v1400 = vsel %vm1382, %v1353, %v1354
        %v1401 = vsel %vm1382, %v1351, %v1352
        %v1402 = vsel %vm1382, %v1350, %v1351
        %v1403 = vsel %vm1382, %v1348, %v1349
        %v1404 = vsel %vm1382, %v1347, %v1348
        %v1405 = vsel %vm1382, %v1345, %v1346
        %v1406 = vsel %vm1382, %v1344, %v1345
        %v1407 = vsel %vm1382, %v1342, %v1343
        %v1408 = vsel %vm1382, %v1341, %v1342
        %v1409 = vsel %vm1382, %v1339, %v1340
        %v1410 = vsel %vm1382, %v1338, %v1339
        %v1411 = vsel %vm1382, %v1336, %v1337
        %v1412 = vsel %vm1382, %v1335, %v1336
        %v1413 = vsel %vm1382, %v1333, %v1334
        %v1414 = vsel %vm1382, %v1332, %v1333
        %v1415 = vmax.f32 %v1269, %v1414
        %v1416 = vmax.f32 %v1270, %v1413
        %v1417 = vmax.f32 %v1273, %v1412
        %v1418 = vmax.f32 %v1274, %v1411
        %v1419 = vmax.f32 %v1277, %v1410
        %v1420 = vmax.f32 %v1278, %v1409
        %v1421 = vmax.f32 %v1281, %v1408
        %v1422 = vmax.f32 %v1282, %v1407
        %v1423 = vmax.f32 %v1285, %v1406
        %v1424 = vmax.f32 %v1286, %v1405
        %v1425 = vmax.f32 %v1289, %v1404
        %v1426 = vmax.f32 %v1290, %v1403
        %v1427 = vmax.f32 %v1293, %v1402
        %v1428 = vmax.f32 %v1294, %v1401
        %v1429 = vmax.f32 %v1297, %v1400
        %v1430 = vmax.f32 %v1298, %v1399
        %v1431 = vmax.f32 %v1301, %v1398
        %v1432 = vmax.f32 %v1302, %v1397
        %v1433 = vmax.f32 %v1305, %v1396
        %v1434 = vmax.f32 %v1306, %v1395
        %v1435 = vmax.f32 %v1309, %v1394
        %v1436 = vmax.f32 %v1310, %v1393
        %v1437 = vmax.f32 %v1313, %v1392
        %v1438 = vmax.f32 %v1314, %v1391
        %v1439 = vmax.f32 %v1317, %v1390
        %v1440 = vmax.f32 %v1318, %v1389
        %v1441 = vmax.f32 %v1321, %v1388
        %v1442 = vmax.f32 %v1322, %v1387
        %v1443 = vmax.f32 %v1325, %v1386
        %v1444 = vmax.f32 %v1326, %v1385
        %v1445 = vmax.f32 %v1329, %v1384
        %v1446 = vmax.f32 %v1330, %v1383
        %v1447 = vrot.slane %v1268, 7
        %v1448 = vrot.slane %v1269, 7
        %v1449 = vrot.slane %v1270, 7
        %v1450 = vrot.slane %v1272, 7
        %v1451 = vrot.slane %v1273, 7
        %v1452 = vrot.slane %v1274, 7
        %v1453 = vrot.slane %v1276, 7
        %v1454 = vrot.slane %v1277, 7
        %v1455 = vrot.slane %v1278, 7
        %v1456 = vrot.slane %v1280, 7
        %v1457 = vrot.slane %v1281, 7
        %v1458 = vrot.slane %v1282, 7
        %v1459 = vrot.slane %v1284, 7
        %v1460 = vrot.slane %v1285, 7
        %v1461 = vrot.slane %v1286, 7
        %v1462 = vrot.slane %v1288, 7
        %v1463 = vrot.slane %v1289, 7
        %v1464 = vrot.slane %v1290, 7
        %v1465 = vrot.slane %v1292, 7
        %v1466 = vrot.slane %v1293, 7
        %v1467 = vrot.slane %v1294, 7
        %v1468 = vrot.slane %v1296, 7
        %v1469 = vrot.slane %v1297, 7
        %v1470 = vrot.slane %v1298, 7
        %v1471 = vrot.slane %v1300, 7
        %v1472 = vrot.slane %v1301, 7
        %v1473 = vrot.slane %v1302, 7
        %v1474 = vrot.slane %v1304, 7
        %v1475 = vrot.slane %v1305, 7
        %v1476 = vrot.slane %v1306, 7
        %v1477 = vrot.slane %v1308, 7
        %v1478 = vrot.slane %v1309, 7
        %v1479 = vrot.slane %v1310, 7
        %v1480 = vrot.slane %v1312, 7
        %v1481 = vrot.slane %v1313, 7
        %v1482 = vrot.slane %v1314, 7
        %v1483 = vrot.slane %v1316, 7
        %v1484 = vrot.slane %v1317, 7
        %v1485 = vrot.slane %v1318, 7
        %v1486 = vrot.slane %v1320, 7
        %v1487 = vrot.slane %v1321, 7
        %v1488 = vrot.slane %v1322, 7
        %v1489 = vrot.slane %v1324, 7
        %v1490 = vrot.slane %v1325, 7
        %v1491 = vrot.slane %v1326, 7
        %v1492 = vrot.slane %v1328, 7
        %v1493 = vrot.slane %v1329, 7
        %v1494 = vrot.slane %v1330, 7
        %vm1495 = vcmp.lt.s32.totalorder %v1381, 1
        %v1496 = vsel %vm1495, %v1493, %v1494
        %v1497 = vsel %vm1495, %v1492, %v1493
        %v1498 = vsel %vm1495, %v1490, %v1491
        %v1499 = vsel %vm1495, %v1489, %v1490
        %v1500 = vsel %vm1495, %v1487, %v1488
        %v1501 = vsel %vm1495, %v1486, %v1487
        %v1502 = vsel %vm1495, %v1484, %v1485
        %v1503 = vsel %vm1495, %v1483, %v1484
        %v1504 = vsel %vm1495, %v1481, %v1482
        %v1505 = vsel %vm1495, %v1480, %v1481
        %v1506 = vsel %vm1495, %v1478, %v1479
        %v1507 = vsel %vm1495, %v1477, %v1478
        %v1508 = vsel %vm1495, %v1475, %v1476
        %v1509 = vsel %vm1495, %v1474, %v1475
        %v1510 = vsel %vm1495, %v1472, %v1473
        %v1511 = vsel %vm1495, %v1471, %v1472
        %v1512 = vsel %vm1495, %v1469, %v1470
        %v1513 = vsel %vm1495, %v1468, %v1469
        %v1514 = vsel %vm1495, %v1466, %v1467
        %v1515 = vsel %vm1495, %v1465, %v1466
        %v1516 = vsel %vm1495, %v1463, %v1464
        %v1517 = vsel %vm1495, %v1462, %v1463
        %v1518 = vsel %vm1495, %v1460, %v1461
        %v1519 = vsel %vm1495, %v1459, %v1460
        %v1520 = vsel %vm1495, %v1457, %v1458
        %v1521 = vsel %vm1495, %v1456, %v1457
        %v1522 = vsel %vm1495, %v1454, %v1455
        %v1523 = vsel %vm1495, %v1453, %v1454
        %v1524 = vsel %vm1495, %v1451, %v1452
        %v1525 = vsel %vm1495, %v1450, %v1451
        %v1526 = vsel %vm1495, %v1448, %v1449
        %v1527 = vsel %vm1495, %v1447, %v1448
        %v1528 = vmax.f32 %v1415, %v1527
        %v1529 = vmax.f32 %v1416, %v1526
        %v1530 = vmax.f32 %v1417, %v1525
        %v1531 = vmax.f32 %v1418, %v1524
        %v1532 = vmax.f32 %v1419, %v1523
        %v1533 = vmax.f32 %v1420, %v1522
        %v1534 = vmax.f32 %v1421, %v1521
        %v1535 = vmax.f32 %v1422, %v1520
        %v1536 = vmax.f32 %v1423, %v1519
        %v1537 = vmax.f32 %v1424, %v1518
        %v1538 = vmax.f32 %v1425, %v1517
        %v1539 = vmax.f32 %v1426, %v1516
        %v1540 = vmax.f32 %v1427, %v1515
        %v1541 = vmax.f32 %v1428, %v1514
        %v1542 = vmax.f32 %v1429, %v1513
        %v1543 = vmax.f32 %v1430, %v1512
        %v1544 = vmax.f32 %v1431, %v1511
        %v1545 = vmax.f32 %v1432, %v1510
        %v1546 = vmax.f32 %v1433, %v1509
        %v1547 = vmax.f32 %v1434, %v1508
        %v1548 = vmax.f32 %v1435, %v1507
        %v1549 = vmax.f32 %v1436, %v1506
        %v1550 = vmax.f32 %v1437, %v1505
        %v1551 = vmax.f32 %v1438, %v1504
        %v1552 = vmax.f32 %v1439, %v1503
        %v1553 = vmax.f32 %v1440, %v1502
        %v1554 = vmax.f32 %v1441, %v1501
        %v1555 = vmax.f32 %v1442, %v1500
        %v1556 = vmax.f32 %v1443, %v1499
        %v1557 = vmax.f32 %v1444, %v1498
        %v1558 = vmax.f32 %v1445, %v1497
        %v1559 = vmax.f32 %v1446, %v1496
        %v1560 = vrot.slane %v1269, 1
        %v1561 = vrot.slane %v1270, 1
        %v1562 = vrot.slane %v1271, 1
        %v1563 = vrot.slane %v1273, 1
        %v1564 = vrot.slane %v1274, 1
        %v1565 = vrot.slane %v1275, 1
        %v1566 = vrot.slane %v1277, 1
        %v1567 = vrot.slane %v1278, 1
        %v1568 = vrot.slane %v1279, 1
        %v1569 = vrot.slane %v1281, 1
        %v1570 = vrot.slane %v1282, 1
        %v1571 = vrot.slane %v1283, 1
        %v1572 = vrot.slane %v1285, 1
        %v1573 = vrot.slane %v1286, 1
        %v1574 = vrot.slane %v1287, 1
        %v1575 = vrot.slane %v1289, 1
        %v1576 = vrot.slane %v1290, 1
        %v1577 = vrot.slane %v1291, 1
        %v1578 = vrot.slane %v1293, 1
        %v1579 = vrot.slane %v1294, 1
        %v1580 = vrot.slane %v1295, 1
        %v1581 = vrot.slane %v1297, 1
        %v1582 = vrot.slane %v1298, 1
        %v1583 = vrot.slane %v1299, 1
        %v1584 = vrot.slane %v1301, 1
        %v1585 = vrot.slane %v1302, 1
        %v1586 = vrot.slane %v1303, 1
        %v1587 = vrot.slane %v1305, 1
        %v1588 = vrot.slane %v1306, 1
        %v1589 = vrot.slane %v1307, 1
        %v1590 = vrot.slane %v1309, 1
        %v1591 = vrot.slane %v1310, 1
        %v1592 = vrot.slane %v1311, 1
        %v1593 = vrot.slane %v1313, 1
        %v1594 = vrot.slane %v1314, 1
        %v1595 = vrot.slane %v1315, 1
        %v1596 = vrot.slane %v1317, 1
        %v1597 = vrot.slane %v1318, 1
        %v1598 = vrot.slane %v1319, 1
        %v1599 = vrot.slane %v1321, 1
        %v1600 = vrot.slane %v1322, 1
        %v1601 = vrot.slane %v1323, 1
        %v1602 = vrot.slane %v1325, 1
        %v1603 = vrot.slane %v1326, 1
        %v1604 = vrot.slane %v1327, 1
        %v1605 = vrot.slane %v1329, 1
        %v1606 = vrot.slane %v1330, 1
        %v1607 = vrot.slane %v1331, 1
        %vm1608 = vcmp.lt.s32.totalorder %v1381, 7
        %v1609 = vsel %vm1608, %v1606, %v1607
        %v1610 = vsel %vm1608, %v1605, %v1606
        %v1611 = vsel %vm1608, %v1603, %v1604
        %v1612 = vsel %vm1608, %v1602, %v1603
        %v1613 = vsel %vm1608, %v1600, %v1601
        %v1614 = vsel %vm1608, %v1599, %v1600
        %v1615 = vsel %vm1608, %v1597, %v1598
        %v1616 = vsel %vm1608, %v1596, %v1597
        %v1617 = vsel %vm1608, %v1594, %v1595
        %v1618 = vsel %vm1608, %v1593, %v1594
        %v1619 = vsel %vm1608, %v1591, %v1592
        %v1620 = vsel %vm1608, %v1590, %v1591
        %v1621 = vsel %vm1608, %v1588, %v1589
        %v1622 = vsel %vm1608, %v1587, %v1588
        %v1623 = vsel %vm1608, %v1585, %v1586
        %v1624 = vsel %vm1608, %v1584, %v1585
        %v1625 = vsel %vm1608, %v1582, %v1583
        %v1626 = vsel %vm1608, %v1581, %v1582
        %v1627 = vsel %vm1608, %v1579, %v1580
        %v1628 = vsel %vm1608, %v1578, %v1579
        %v1629 = vsel %vm1608, %v1576, %v1577
        %v1630 = vsel %vm1608, %v1575, %v1576
        %v1631 = vsel %vm1608, %v1573, %v1574
        %v1632 = vsel %vm1608, %v1572, %v1573
        %v1633 = vsel %vm1608, %v1570, %v1571
        %v1634 = vsel %vm1608, %v1569, %v1570
        %v1635 = vsel %vm1608, %v1567, %v1568
        %v1636 = vsel %vm1608, %v1566, %v1567
        %v1637 = vsel %vm1608, %v1564, %v1565
        %v1638 = vsel %vm1608, %v1563, %v1564
        %v1639 = vsel %vm1608, %v1561, %v1562
        %v1640 = vsel %vm1608, %v1560, %v1561
        %v1641 = vmax.f32 %v1528, %v1640
        %v1642 = vmax.f32 %v1529, %v1639
        %v1643 = vmax.f32 %v1530, %v1638
        %v1644 = vmax.f32 %v1531, %v1637
        %v1645 = vmax.f32 %v1532, %v1636
        %v1646 = vmax.f32 %v1533, %v1635
        %v1647 = vmax.f32 %v1534, %v1634
        %v1648 = vmax.f32 %v1535, %v1633
        %v1649 = vmax.f32 %v1536, %v1632
        %v1650 = vmax.f32 %v1537, %v1631
        %v1651 = vmax.f32 %v1538, %v1630
        %v1652 = vmax.f32 %v1539, %v1629
        %v1653 = vmax.f32 %v1540, %v1628
        %v1654 = vmax.f32 %v1541, %v1627
        %v1655 = vmax.f32 %v1542, %v1626
        %v1656 = vmax.f32 %v1543, %v1625
        %v1657 = vmax.f32 %v1544, %v1624
        %v1658 = vmax.f32 %v1545, %v1623
        %v1659 = vmax.f32 %v1546, %v1622
        %v1660 = vmax.f32 %v1547, %v1621
        %v1661 = vmax.f32 %v1548, %v1620
        %v1662 = vmax.f32 %v1549, %v1619
        %v1663 = vmax.f32 %v1550, %v1618
        %v1664 = vmax.f32 %v1551, %v1617
        %v1665 = vmax.f32 %v1552, %v1616
        %v1666 = vmax.f32 %v1553, %v1615
        %v1667 = vmax.f32 %v1554, %v1614
        %v1668 = vmax.f32 %v1555, %v1613
        %v1669 = vmax.f32 %v1556, %v1612
        %v1670 = vmax.f32 %v1557, %v1611
        %v1671 = vmax.f32 %v1558, %v1610
        %v1672 = vmax.f32 %v1559, %v1609
        %v1673 = vrot.slane %v1269, 2
        %v1674 = vrot.slane %v1270, 2
        %v1675 = vrot.slane %v1271, 2
        %v1676 = vrot.slane %v1273, 2
        %v1677 = vrot.slane %v1274, 2
        %v1678 = vrot.slane %v1275, 2
        %v1679 = vrot.slane %v1277, 2
        %v1680 = vrot.slane %v1278, 2
        %v1681 = vrot.slane %v1279, 2
        %v1682 = vrot.slane %v1281, 2
        %v1683 = vrot.slane %v1282, 2
        %v1684 = vrot.slane %v1283, 2
        %v1685 = vrot.slane %v1285, 2
        %v1686 = vrot.slane %v1286, 2
        %v1687 = vrot.slane %v1287, 2
        %v1688 = vrot.slane %v1289, 2
        %v1689 = vrot.slane %v1290, 2
        %v1690 = vrot.slane %v1291, 2
        %v1691 = vrot.slane %v1293, 2
        %v1692 = vrot.slane %v1294, 2
        %v1693 = vrot.slane %v1295, 2
        %v1694 = vrot.slane %v1297, 2
        %v1695 = vrot.slane %v1298, 2
        %v1696 = vrot.slane %v1299, 2
        %v1697 = vrot.slane %v1301, 2
        %v1698 = vrot.slane %v1302, 2
        %v1699 = vrot.slane %v1303, 2
        %v1700 = vrot.slane %v1305, 2
        %v1701 = vrot.slane %v1306, 2
        %v1702 = vrot.slane %v1307, 2
        %v1703 = vrot.slane %v1309, 2
        %v1704 = vrot.slane %v1310, 2
        %v1705 = vrot.slane %v1311, 2
        %v1706 = vrot.slane %v1313, 2
        %v1707 = vrot.slane %v1314, 2
        %v1708 = vrot.slane %v1315, 2
        %v1709 = vrot.slane %v1317, 2
        %v1710 = vrot.slane %v1318, 2
        %v1711 = vrot.slane %v1319, 2
        %v1712 = vrot.slane %v1321, 2
        %v1713 = vrot.slane %v1322, 2
        %v1714 = vrot.slane %v1323, 2
        %v1715 = vrot.slane %v1325, 2
        %v1716 = vrot.slane %v1326, 2
        %v1717 = vrot.slane %v1327, 2
        %v1718 = vrot.slane %v1329, 2
        %v1719 = vrot.slane %v1330, 2
        %v1720 = vrot.slane %v1331, 2
        %vm1721 = vcmp.lt.s32.totalorder %v1381, 6
        %v1722 = vsel %vm1721, %v1719, %v1720
        %v1723 = vsel %vm1721, %v1718, %v1719
        %v1724 = vsel %vm1721, %v1716, %v1717
        %v1725 = vsel %vm1721, %v1715, %v1716
        %v1726 = vsel %vm1721, %v1713, %v1714
        %v1727 = vsel %vm1721, %v1712, %v1713
        %v1728 = vsel %vm1721, %v1710, %v1711
        %v1729 = vsel %vm1721, %v1709, %v1710
        %v1730 = vsel %vm1721, %v1707, %v1708
        %v1731 = vsel %vm1721, %v1706, %v1707
        %v1732 = vsel %vm1721, %v1704, %v1705
        %v1733 = vsel %vm1721, %v1703, %v1704
        %v1734 = vsel %vm1721, %v1701, %v1702
        %v1735 = vsel %vm1721, %v1700, %v1701
        %v1736 = vsel %vm1721, %v1698, %v1699
        %v1737 = vsel %vm1721, %v1697, %v1698
        %v1738 = vsel %vm1721, %v1695, %v1696
        %v1739 = vsel %vm1721, %v1694, %v1695
        %v1740 = vsel %vm1721, %v1692, %v1693
        %v1741 = vsel %vm1721, %v1691, %v1692
        %v1742 = vsel %vm1721, %v1689, %v1690
        %v1743 = vsel %vm1721, %v1688, %v1689
        %v1744 = vsel %vm1721, %v1686, %v1687
        %v1745 = vsel %vm1721, %v1685, %v1686
        %v1746 = vsel %vm1721, %v1683, %v1684
        %v1747 = vsel %vm1721, %v1682, %v1683
        %v1748 = vsel %vm1721, %v1680, %v1681
        %v1749 = vsel %vm1721, %v1679, %v1680
        %v1750 = vsel %vm1721, %v1677, %v1678
        %v1751 = vsel %vm1721, %v1676, %v1677
        %v1752 = vsel %vm1721, %v1674, %v1675
        %v1753 = vsel %vm1721, %v1673, %v1674
        %v1754 = vmax.f32 %v1641, %v1753
        %v1755 = vmax.f32 %v1642, %v1752
        %v1756 = vmax.f32 %v1643, %v1751
        %v1757 = vmax.f32 %v1644, %v1750
        %v1758 = vmax.f32 %v1645, %v1749
        %v1759 = vmax.f32 %v1646, %v1748
        %v1760 = vmax.f32 %v1647, %v1747
        %v1761 = vmax.f32 %v1648, %v1746
        %v1762 = vmax.f32 %v1649, %v1745
        %v1763 = vmax.f32 %v1650, %v1744
        %v1764 = vmax.f32 %v1651, %v1743
        %v1765 = vmax.f32 %v1652, %v1742
        %v1766 = vmax.f32 %v1653, %v1741
        %v1767 = vmax.f32 %v1654, %v1740
        %v1768 = vmax.f32 %v1655, %v1739
        %v1769 = vmax.f32 %v1656, %v1738
        %v1770 = vmax.f32 %v1657, %v1737
        %v1771 = vmax.f32 %v1658, %v1736
        %v1772 = vmax.f32 %v1659, %v1735
        %v1773 = vmax.f32 %v1660, %v1734
        %v1774 = vmax.f32 %v1661, %v1733
        %v1775 = vmax.f32 %v1662, %v1732
        %v1776 = vmax.f32 %v1663, %v1731
        %v1777 = vmax.f32 %v1664, %v1730
        %v1778 = vmax.f32 %v1665, %v1729
        %v1779 = vmax.f32 %v1666, %v1728
        %v1780 = vmax.f32 %v1667, %v1727
        %v1781 = vmax.f32 %v1668, %v1726
        %v1782 = vmax.f32 %v1669, %v1725
        %v1783 = vmax.f32 %v1670, %v1724
        %v1784 = vmax.f32 %v1671, %v1723
        %v1785 = vmax.f32 %v1672, %v1722
        %s1786 = sadd.s32 %s894, 1
        %s1787 = smul.addr %s1786, 2
        %s1788 = scalar_lea.vmem %s3, %s1787
        %v1789 = vld [vmem:[%s1788] sm:$0x3]
        %v1790 = vpack.c.bf16 %v1755, %v1754
        %v1791 = vpack.c.bf16 %v1757, %v1756
        %v1792 = vpack.c.bf16 %v1759, %v1758
        %v1793 = vpack.c.bf16 %v1761, %v1760
        %v1794 = vpack.c.bf16 %v1763, %v1762
        %v1795 = vpack.c.bf16 %v1765, %v1764
        %v1796 = vpack.c.bf16 %v1767, %v1766
        %v1797 = vpack.c.bf16 %v1769, %v1768
        %v1798 = vpack.c.bf16 %v1771, %v1770
        %v1799 = vpack.c.bf16 %v1773, %v1772
        %v1800 = vpack.c.bf16 %v1775, %v1774
        %v1801 = vpack.c.bf16 %v1777, %v1776
        %v1802 = vpack.c.bf16 %v1779, %v1778
        %v1803 = vpack.c.bf16 %v1781, %v1780
        %v1804 = vpack.c.bf16 %v1783, %v1782
        %v1805 = vpack.c.bf16 %v1785, %v1784
        %v1807 = vsel %vm694, %v1790, 0
        %v1810 = vsel %vm694, %v1791, 0
        %v1813 = vsel %vm694, %v1792, 0
        %v1816 = vsel %vm694, %v1793, 0
        %v1819 = vsel %vm694, %v1794, 0
        %v1822 = vsel %vm694, %v1795, 0
        %v1825 = vsel %vm694, %v1796, 0
        %v1828 = vsel %vm694, %v1797, 0
        %v1831 = vsel %vm694, %v1798, 0
        %v1834 = vsel %vm694, %v1799, 0
        %v1837 = vsel %vm694, %v1800, 0
        %v1840 = vsel %vm694, %v1801, 0
        %v1843 = vsel %vm694, %v1802, 0
        %v1846 = vsel %vm694, %v1803, 0
        %v1849 = vsel %vm694, %v1804, 0
        %v1852 = vsel %vm694, %v1805, 0
        %v1855 = vsel %vm743, %v1789, 0
        %1857 = vmatpush.bf16.msra.mxu0 0
        %1858 = vmatpush.bf16.msra.mxu0 0
        %1859 = vmatpush.bf16.msra.mxu0 0
        %1860 = vmatpush.bf16.msra.mxu0 0
        %1861 = vmatpush.bf16.msra.mxu0 0
        %1862 = vmatpush.bf16.msra.mxu0 0
        %1863 = vmatpush.bf16.msra.mxu0 0
        %1864 = vmatpush.bf16.msra.mxu0 %v1855
        %1865 = vmatmul.bf16.gmra.mxu0 %v1807
        %v1866 = vpop.f32.mrf.mxu0
        %v1867 = vadd.f32 0.0, %v1866
        %v1868 = vpop.f32.mrf.mxu0
        %v1869 = vadd.f32 0.0, %v1868
        %1870 = vmatmul.bf16.gmra.mxu0 %v1810
        %v1871 = vpop.f32.mrf.mxu0
        %v1872 = vadd.f32 0.0, %v1871
        %v1873 = vpop.f32.mrf.mxu0
        %v1874 = vadd.f32 0.0, %v1873
        %1875 = vmatmul.bf16.gmra.mxu0 %v1813
        %v1876 = vpop.f32.mrf.mxu0
        %v1877 = vadd.f32 0.0, %v1876
        %v1878 = vpop.f32.mrf.mxu0
        %v1879 = vadd.f32 0.0, %v1878
        %1880 = vmatmul.bf16.gmra.mxu0 %v1816
        %v1881 = vpop.f32.mrf.mxu0
        %v1882 = vadd.f32 0.0, %v1881
        %v1883 = vpop.f32.mrf.mxu0
        %v1884 = vadd.f32 0.0, %v1883
        %1885 = vmatmul.bf16.gmra.mxu0 %v1819
        %v1886 = vpop.f32.mrf.mxu0
        %v1887 = vadd.f32 0.0, %v1886
        %v1888 = vpop.f32.mrf.mxu0
        %v1889 = vadd.f32 0.0, %v1888
        %1890 = vmatmul.bf16.gmra.mxu0 %v1822
        %v1891 = vpop.f32.mrf.mxu0
        %v1892 = vadd.f32 0.0, %v1891
        %v1893 = vpop.f32.mrf.mxu0
        %v1894 = vadd.f32 0.0, %v1893
        %1895 = vmatmul.bf16.gmra.mxu0 %v1825
        %v1896 = vpop.f32.mrf.mxu0
        %v1897 = vadd.f32 0.0, %v1896
        %v1898 = vpop.f32.mrf.mxu0
        %v1899 = vadd.f32 0.0, %v1898
        %1900 = vmatmul.bf16.gmra.mxu0 %v1828
        %v1901 = vpop.f32.mrf.mxu0
        %v1902 = vadd.f32 0.0, %v1901
        %v1903 = vpop.f32.mrf.mxu0
        %v1904 = vadd.f32 0.0, %v1903
        %1905 = vmatmul.bf16.gmra.mxu0 %v1831
        %v1906 = vpop.f32.mrf.mxu0
        %v1907 = vadd.f32 0.0, %v1906
        %v1908 = vpop.f32.mrf.mxu0
        %v1909 = vadd.f32 0.0, %v1908
        %1910 = vmatmul.bf16.gmra.mxu0 %v1834
        %v1911 = vpop.f32.mrf.mxu0
        %v1912 = vadd.f32 0.0, %v1911
        %v1913 = vpop.f32.mrf.mxu0
        %v1914 = vadd.f32 0.0, %v1913
        %1915 = vmatmul.bf16.gmra.mxu0 %v1837
        %v1916 = vpop.f32.mrf.mxu0
        %v1917 = vadd.f32 0.0, %v1916
        %v1918 = vpop.f32.mrf.mxu0
        %v1919 = vadd.f32 0.0, %v1918
        %1920 = vmatmul.bf16.gmra.mxu0 %v1840
        %v1921 = vpop.f32.mrf.mxu0
        %v1922 = vadd.f32 0.0, %v1921
        %v1923 = vpop.f32.mrf.mxu0
        %v1924 = vadd.f32 0.0, %v1923
        %1925 = vmatmul.bf16.gmra.mxu0 %v1843
        %v1926 = vpop.f32.mrf.mxu0
        %v1927 = vadd.f32 0.0, %v1926
        %v1928 = vpop.f32.mrf.mxu0
        %v1929 = vadd.f32 0.0, %v1928
        %1930 = vmatmul.bf16.gmra.mxu0 %v1846
        %v1931 = vpop.f32.mrf.mxu0
        %v1932 = vadd.f32 0.0, %v1931
        %v1933 = vpop.f32.mrf.mxu0
        %v1934 = vadd.f32 0.0, %v1933
        %1935 = vmatmul.bf16.gmra.mxu0 %v1849
        %v1936 = vpop.f32.mrf.mxu0
        %v1937 = vadd.f32 0.0, %v1936
        %v1938 = vpop.f32.mrf.mxu0
        %v1939 = vadd.f32 0.0, %v1938
        %1940 = vmatmul.bf16.gmra.mxu0 %v1852
        %v1941 = vpop.f32.mrf.mxu0
        %v1942 = vadd.f32 0.0, %v1941
        %v1943 = vpop.f32.mrf.mxu0
        %v1944 = vadd.f32 0.0, %v1943
        %1945 = vdwg.mxu0
        %v1946 = vadd.f32 %v899, %v1867
        %v1947 = vadd.f32 %v900, %v1869
        %v1948 = vadd.f32 %v901, %v1872
        %v1949 = vadd.f32 %v902, %v1874
        %v1950 = vadd.f32 %v903, %v1877
        %v1951 = vadd.f32 %v904, %v1879
        %v1952 = vadd.f32 %v905, %v1882
        %v1953 = vadd.f32 %v906, %v1884
        %v1954 = vadd.f32 %v907, %v1887
        %v1955 = vadd.f32 %v908, %v1889
        %v1956 = vadd.f32 %v909, %v1892
        %v1957 = vadd.f32 %v910, %v1894
        %v1958 = vadd.f32 %v911, %v1897
        %v1959 = vadd.f32 %v912, %v1899
        %v1960 = vadd.f32 %v913, %v1902
        %v1961 = vadd.f32 %v914, %v1904
        %v1962 = vadd.f32 %v915, %v1907
        %v1963 = vadd.f32 %v916, %v1909
        %v1964 = vadd.f32 %v917, %v1912
        %v1965 = vadd.f32 %v918, %v1914
        %v1966 = vadd.f32 %v919, %v1917
        %v1967 = vadd.f32 %v920, %v1919
        %v1968 = vadd.f32 %v921, %v1922
        %v1969 = vadd.f32 %v922, %v1924
        %v1970 = vadd.f32 %v923, %v1927
        %v1971 = vadd.f32 %v924, %v1929
        %v1972 = vadd.f32 %v925, %v1932
        %v1973 = vadd.f32 %v926, %v1934
        %v1974 = vadd.f32 %v927, %v1937
        %v1975 = vadd.f32 %v928, %v1939
        %v1976 = vadd.f32 %v929, %v1942
        %v1977 = vadd.f32 %v930, %v1944
      $region45: #{tpu_custom_call.1} parent=39 // loop_footer
        %s898 = sadd.s32 1, %s894
      $region46: #{tpu_custom_call.1} parent=39 // loop_footer_branch
        %893 = sbr.rel target = $region42
      $region47: #{tpu_custom_call.1} parent=39 // loop_exit
        _
      %v1978 = vld [vmem:[%s4] sm:$0x1]
      %v1980 = vperm.slane %v1978, 0
      %v1982 = vadd.f32 %v899, %v1980
      %v1983 = vadd.f32 %v900, %v1980
      %v1984 = vadd.f32 %v901, %v1980
      %v1985 = vadd.f32 %v902, %v1980
      %v1986 = vadd.f32 %v903, %v1980
      %v1987 = vadd.f32 %v904, %v1980
      %v1988 = vadd.f32 %v905, %v1980
      %v1989 = vadd.f32 %v906, %v1980
      %v1990 = vadd.f32 %v907, %v1980
      %v1991 = vadd.f32 %v908, %v1980
      %v1992 = vadd.f32 %v909, %v1980
      %v1993 = vadd.f32 %v910, %v1980
      %v1994 = vadd.f32 %v911, %v1980
      %v1995 = vadd.f32 %v912, %v1980
      %v1996 = vadd.f32 %v913, %v1980
      %v1997 = vadd.f32 %v914, %v1980
      %v1998 = vadd.f32 %v915, %v1980
      %v1999 = vadd.f32 %v916, %v1980
      %v2000 = vadd.f32 %v917, %v1980
      %v2001 = vadd.f32 %v918, %v1980
      %v2002 = vadd.f32 %v919, %v1980
      %v2003 = vadd.f32 %v920, %v1980
      %v2004 = vadd.f32 %v921, %v1980
      %v2005 = vadd.f32 %v922, %v1980
      %v2006 = vadd.f32 %v923, %v1980
      %v2007 = vadd.f32 %v924, %v1980
      %v2008 = vadd.f32 %v925, %v1980
      %v2009 = vadd.f32 %v926, %v1980
      %v2010 = vadd.f32 %v927, %v1980
      %v2011 = vadd.f32 %v928, %v1980
      %v2012 = vadd.f32 %v929, %v1980
      %v2013 = vadd.f32 %v930, %v1980
      %v2014 = vsub.f32 0.0, %v1982
      %v2015 = vsub.f32 0.0, %v1983
      %v2016 = vsub.f32 0.0, %v1984
      %v2017 = vsub.f32 0.0, %v1985
      %v2018 = vsub.f32 0.0, %v1986
      %v2019 = vsub.f32 0.0, %v1987
      %v2020 = vsub.f32 0.0, %v1988
      %v2021 = vsub.f32 0.0, %v1989
      %v2022 = vsub.f32 0.0, %v1990
      %v2023 = vsub.f32 0.0, %v1991
      %v2024 = vsub.f32 0.0, %v1992
      %v2025 = vsub.f32 0.0, %v1993
      %v2026 = vsub.f32 0.0, %v1994
      %v2027 = vsub.f32 0.0, %v1995
      %v2028 = vsub.f32 0.0, %v1996
      %v2029 = vsub.f32 0.0, %v1997
      %v2030 = vsub.f32 0.0, %v1998
      %v2031 = vsub.f32 0.0, %v1999
      %v2032 = vsub.f32 0.0, %v2000
      %v2033 = vsub.f32 0.0, %v2001
      %v2034 = vsub.f32 0.0, %v2002
      %v2035 = vsub.f32 0.0, %v2003
      %v2036 = vsub.f32 0.0, %v2004
      %v2037 = vsub.f32 0.0, %v2005
      %v2038 = vsub.f32 0.0, %v2006
      %v2039 = vsub.f32 0.0, %v2007
      %v2040 = vsub.f32 0.0, %v2008
      %v2041 = vsub.f32 0.0, %v2009
      %v2042 = vsub.f32 0.0, %v2010
      %v2043 = vsub.f32 0.0, %v2011
      %v2044 = vsub.f32 0.0, %v2012
      %v2045 = vsub.f32 0.0, %v2013
      %v2046 = vmul.f32 %v2014, 1.442695
      %v2047 = vpow.pop %v2046
      %v2048 = vmul.f32 %v2015, 1.442695
      %v2049 = vpow.pop %v2048
      %v2050 = vmul.f32 %v2016, 1.442695
      %v2051 = vpow.pop %v2050
      %v2052 = vmul.f32 %v2017, 1.442695
      %v2053 = vpow.pop %v2052
      %v2054 = vmul.f32 %v2018, 1.442695
      %v2055 = vpow.pop %v2054
      %v2056 = vmul.f32 %v2019, 1.442695
      %v2057 = vpow.pop %v2056
      %v2058 = vmul.f32 %v2020, 1.442695
      %v2059 = vpow.pop %v2058
      %v2060 = vmul.f32 %v2021, 1.442695
      %v2061 = vpow.pop %v2060
      %v2062 = vmul.f32 %v2022, 1.442695
      %v2063 = vpow.pop %v2062
      %v2064 = vmul.f32 %v2023, 1.442695
      %v2065 = vpow.pop %v2064
      %v2066 = vmul.f32 %v2024, 1.442695
      %v2067 = vpow.pop %v2066
      %v2068 = vmul.f32 %v2025, 1.442695
      %v2069 = vpow.pop %v2068
      %v2070 = vmul.f32 %v2026, 1.442695
      %v2071 = vpow.pop %v2070
      %v2072 = vmul.f32 %v2027, 1.442695
      %v2073 = vpow.pop %v2072
      %v2074 = vmul.f32 %v2028, 1.442695
      %v2075 = vpow.pop %v2074
      %v2076 = vmul.f32 %v2029, 1.442695
      %v2077 = vpow.pop %v2076
      %v2078 = vmul.f32 %v2030, 1.442695
      %v2079 = vpow.pop %v2078
      %v2080 = vmul.f32 %v2031, 1.442695
      %v2081 = vpow.pop %v2080
      %v2082 = vmul.f32 %v2032, 1.442695
      %v2083 = vpow.pop %v2082
      %v2084 = vmul.f32 %v2033, 1.442695
      %v2085 = vpow.pop %v2084
      %v2086 = vmul.f32 %v2034, 1.442695
      %v2087 = vpow.pop %v2086
      %v2088 = vmul.f32 %v2035, 1.442695
      %v2089 = vpow.pop %v2088
      %v2090 = vmul.f32 %v2036, 1.442695
      %v2091 = vpow.pop %v2090
      %v2092 = vmul.f32 %v2037, 1.442695
      %v2093 = vpow.pop %v2092
      %v2094 = vmul.f32 %v2038, 1.442695
      %v2095 = vpow.pop %v2094
      %v2096 = vmul.f32 %v2039, 1.442695
      %v2097 = vpow.pop %v2096
      %v2098 = vmul.f32 %v2040, 1.442695
      %v2099 = vpow.pop %v2098
      %v2100 = vmul.f32 %v2041, 1.442695
      %v2101 = vpow.pop %v2100
      %v2102 = vmul.f32 %v2042, 1.442695
      %v2103 = vpow.pop %v2102
      %v2104 = vmul.f32 %v2043, 1.442695
      %v2105 = vpow.pop %v2104
      %v2106 = vmul.f32 %v2044, 1.442695
      %v2107 = vpow.pop %v2106
      %v2108 = vmul.f32 %v2045, 1.442695
      %v2109 = vpow.pop %v2108
      %v2110 = vadd.f32 %v2047, 1.0
      %v2111 = vadd.f32 %v2049, 1.0
      %v2112 = vadd.f32 %v2051, 1.0
      %v2113 = vadd.f32 %v2053, 1.0
      %v2114 = vadd.f32 %v2055, 1.0
      %v2115 = vadd.f32 %v2057, 1.0
      %v2116 = vadd.f32 %v2059, 1.0
      %v2117 = vadd.f32 %v2061, 1.0
      %v2118 = vadd.f32 %v2063, 1.0
      %v2119 = vadd.f32 %v2065, 1.0
      %v2120 = vadd.f32 %v2067, 1.0
      %v2121 = vadd.f32 %v2069, 1.0
      %v2122 = vadd.f32 %v2071, 1.0
      %v2123 = vadd.f32 %v2073, 1.0
      %v2124 = vadd.f32 %v2075, 1.0
      %v2125 = vadd.f32 %v2077, 1.0
      %v2126 = vadd.f32 %v2079, 1.0
      %v2127 = vadd.f32 %v2081, 1.0
      %v2128 = vadd.f32 %v2083, 1.0
      %v2129 = vadd.f32 %v2085, 1.0
      %v2130 = vadd.f32 %v2087, 1.0
      %v2131 = vadd.f32 %v2089, 1.0
      %v2132 = vadd.f32 %v2091, 1.0
      %v2133 = vadd.f32 %v2093, 1.0
      %v2134 = vadd.f32 %v2095, 1.0
      %v2135 = vadd.f32 %v2097, 1.0
      %v2136 = vadd.f32 %v2099, 1.0
      %v2137 = vadd.f32 %v2101, 1.0
      %v2138 = vadd.f32 %v2103, 1.0
      %v2139 = vadd.f32 %v2105, 1.0
      %v2140 = vadd.f32 %v2107, 1.0
      %v2141 = vadd.f32 %v2109, 1.0
      %v2142 = vrcp.pop %v2110
      %v2143 = vrcp.pop %v2111
      %v2144 = vrcp.pop %v2112
      %v2145 = vrcp.pop %v2113
      %v2146 = vrcp.pop %v2114
      %v2147 = vrcp.pop %v2115
      %v2148 = vrcp.pop %v2116
      %v2149 = vrcp.pop %v2117
      %v2150 = vrcp.pop %v2118
      %v2151 = vrcp.pop %v2119
      %v2152 = vrcp.pop %v2120
      %v2153 = vrcp.pop %v2121
      %v2154 = vrcp.pop %v2122
      %v2155 = vrcp.pop %v2123
      %v2156 = vrcp.pop %v2124
      %v2157 = vrcp.pop %v2125
      %v2158 = vrcp.pop %v2126
      %v2159 = vrcp.pop %v2127
      %v2160 = vrcp.pop %v2128
      %v2161 = vrcp.pop %v2129
      %v2162 = vrcp.pop %v2130
      %v2163 = vrcp.pop %v2131
      %v2164 = vrcp.pop %v2132
      %v2165 = vrcp.pop %v2133
      %v2166 = vrcp.pop %v2134
      %v2167 = vrcp.pop %v2135
      %v2168 = vrcp.pop %v2136
      %v2169 = vrcp.pop %v2137
      %v2170 = vrcp.pop %v2138
      %v2171 = vrcp.pop %v2139
      %v2172 = vrcp.pop %v2140
      %v2173 = vrcp.pop %v2141
      %v2174 = vmul.f32 %v1982, %v2142
      %v2175 = vmul.f32 %v1983, %v2143
      %v2176 = vmul.f32 %v1984, %v2144
      %v2177 = vmul.f32 %v1985, %v2145
      %v2178 = vmul.f32 %v1986, %v2146
      %v2179 = vmul.f32 %v1987, %v2147
      %v2180 = vmul.f32 %v1988, %v2148
      %v2181 = vmul.f32 %v1989, %v2149
      %v2182 = vmul.f32 %v1990, %v2150
      %v2183 = vmul.f32 %v1991, %v2151
      %v2184 = vmul.f32 %v1992, %v2152
      %v2185 = vmul.f32 %v1993, %v2153
      %v2186 = vmul.f32 %v1994, %v2154
      %v2187 = vmul.f32 %v1995, %v2155
      %v2188 = vmul.f32 %v1996, %v2156
      %v2189 = vmul.f32 %v1997, %v2157
      %v2190 = vmul.f32 %v1998, %v2158
      %v2191 = vmul.f32 %v1999, %v2159
      %v2192 = vmul.f32 %v2000, %v2160
      %v2193 = vmul.f32 %v2001, %v2161
      %v2194 = vmul.f32 %v2002, %v2162
      %v2195 = vmul.f32 %v2003, %v2163
      %v2196 = vmul.f32 %v2004, %v2164
      %v2197 = vmul.f32 %v2005, %v2165
      %v2198 = vmul.f32 %v2006, %v2166
      %v2199 = vmul.f32 %v2007, %v2167
      %v2200 = vmul.f32 %v2008, %v2168
      %v2201 = vmul.f32 %v2009, %v2169
      %v2202 = vmul.f32 %v2010, %v2170
      %v2203 = vmul.f32 %v2011, %v2171
      %v2204 = vmul.f32 %v2012, %v2172
      %v2205 = vmul.f32 %v2013, %v2173
      %2206 = vst.msk [vmem:[%s224] sm:$0xff] %vm343, %v2174
      %2207 = vst.msk [vmem:[%s224 + $0x8] sm:$0xff] %vm343, %v2175
      %2208 = vst.msk [vmem:[%s224 + $0x10] sm:$0xff] %vm343, %v2176
      %2209 = vst.msk [vmem:[%s224 + $0x18] sm:$0xff] %vm343, %v2177
      %2210 = vst.msk [vmem:[%s224 + $0x20] sm:$0xff] %vm343, %v2178
      %2211 = vst.msk [vmem:[%s224 + $0x28] sm:$0xff] %vm343, %v2179
      %2212 = vst.msk [vmem:[%s224 + $0x30] sm:$0xff] %vm343, %v2180
      %2213 = vst.msk [vmem:[%s224 + $0x38] sm:$0xff] %vm343, %v2181
      %2214 = vst.msk [vmem:[%s224 + $0x40] sm:$0xff] %vm343, %v2182
      %2215 = vst.msk [vmem:[%s224 + $0x48] sm:$0xff] %vm343, %v2183
      %2216 = vst.msk [vmem:[%s224 + $0x50] sm:$0xff] %vm343, %v2184
      %2217 = vst.msk [vmem:[%s224 + $0x58] sm:$0xff] %vm343, %v2185
      %2218 = vst.msk [vmem:[%s224 + $0x60] sm:$0xff] %vm343, %v2186
      %2219 = vst.msk [vmem:[%s224 + $0x68] sm:$0xff] %vm343, %v2187
      %2220 = vst.msk [vmem:[%s224 + $0x70] sm:$0xff] %vm343, %v2188
      %2221 = vst.msk [vmem:[%s224 + $0x78] sm:$0xff] %vm343, %v2189
      %2222 = vst.msk [vmem:[%s224 + $0x80] sm:$0xff] %vm343, %v2190
      %2223 = vst.msk [vmem:[%s224 + $0x88] sm:$0xff] %vm343, %v2191
      %2224 = vst.msk [vmem:[%s224 + $0x90] sm:$0xff] %vm343, %v2192
      %2225 = vst.msk [vmem:[%s224 + $0x98] sm:$0xff] %vm343, %v2193
      %2226 = vst.msk [vmem:[%s224 + $0xa0] sm:$0xff] %vm343, %v2194
      %2227 = vst.msk [vmem:[%s224 + $0xa8] sm:$0xff] %vm343, %v2195
      %2228 = vst.msk [vmem:[%s224 + $0xb0] sm:$0xff] %vm343, %v2196
      %2229 = vst.msk [vmem:[%s224 + $0xb8] sm:$0xff] %vm343, %v2197
      %2230 = vst.msk [vmem:[%s224 + $0xc0] sm:$0xff] %vm343, %v2198
      %2231 = vst.msk [vmem:[%s224 + $0xc8] sm:$0xff] %vm343, %v2199
      %2232 = vst.msk [vmem:[%s224 + $0xd0] sm:$0xff] %vm343, %v2200
      %2233 = vst.msk [vmem:[%s224 + $0xd8] sm:$0xff] %vm343, %v2201
      %2234 = vst.msk [vmem:[%s224 + $0xe0] sm:$0xff] %vm343, %v2202
      %2235 = vst.msk [vmem:[%s224 + $0xe8] sm:$0xff] %vm343, %v2203
      %2236 = vst.msk [vmem:[%s224 + $0xf0] sm:$0xff] %vm343, %v2204
      %2237 = vst.msk [vmem:[%s224 + $0xf8] sm:$0xff] %vm343, %v2205
      %p2238 = scmp.lt.s32.totalorder %s16, 1
      %s2239 = scalar_select %p2238, %s16, 1
      %s2240 = smul.addr %s2239, 32
      %s2241 = smul.addr %s2240, 8
      %s2242 = scalar_lea.vmem %s5, %s2241
      // Predicated region
      $region48: #{tpu_custom_call.1} parent=39 // pred_check
        %p2243 = pneg %p144
      $region49: #{tpu_custom_call.1} parent=39 // pred_check_branch
        %2245 = sbr.rel (%p2243) target = $region51
      $region50: #{tpu_custom_call.1} parent=39 // pred_region
        _
      $region51: #{tpu_custom_call.1} parent=39 // pred_fallthru
        _
    $region40: #{tpu_custom_call.1} parent=5 // pred_fallthru
      _
    %p2246 = scmp.le.s32.totalorder 2, %s11
    // Predicated region
    $region52: #{tpu_custom_call.1} parent=5 // pred_check
      %p2247 = pneg %p2246
    $region53: #{tpu_custom_call.1} parent=5 // pred_check_branch
      %2249 = sbr.rel (%p2247) target = $region55
    $region54: #{tpu_custom_call.1} parent=5 // pred_region
      %s2250 = ssub.s32 %s11, 2
      // Predicated region
      $region56: #{tpu_custom_call.1} parent=54 // pred_check
        %p2251 = pneg %p150
      $region57: #{tpu_custom_call.1} parent=54 // pred_check_branch
        %2253 = sbr.rel (%p2251) target = $region59
      $region58: #{tpu_custom_call.1} parent=54 // pred_region
        %p2254 = scmp.lt.s32.totalorder %s17, 1
        %s2255 = scalar_select %p2254, %s17, 1
        %s2256 = smul.addr %s2255, 32
        %s2257 = smul.addr %s2256, 8
        %s2258 = scalar_lea.vmem %s5, %s2257
      $region59: #{tpu_custom_call.1} parent=54 // pred_fallthru
        _
    $region55: #{tpu_custom_call.1} parent=5 // pred_fallthru
      _
  $region6: #{tpu_custom_call.1} parent=0 // loop_footer
    %s15 = sadd.s32 1, %s11
  $region7: #{tpu_custom_call.1} parent=0 // loop_footer_branch
    %10 = sbr.rel target = $region3
  $region8: #{tpu_custom_call.1} parent=0 // loop_exit
    _

</llo_original>
